<compile_context>
chip_gen: v5e
topology: v5e:2x2
jax: 0.10.0
libtpu: 0.0.40
codegen_flags: <defaults>
</compile_context>

<pallas_src>
import functools

import jax
import jax.numpy as jnp
import numpy as np
from jax import lax
from jax.experimental import pallas as pl
from jax.experimental.pallas import tpu as pltpu


def _round_up(x, m):
    return (x + m - 1) // m * m


def _default_compute_dtype():
    """bf16 add/tanh/MXU on chips with a bf16 VALU/EUP (v6e/v7x); f32 elsewhere (v5e)."""
    try:
        kind = jax.devices()[0].device_kind.lower()
    except Exception:
        return jnp.float32
    if ("v6" in kind) or ("v7" in kind) or ("7x" in kind):
        return jnp.bfloat16
    return jnp.float32


def _vmem_budget_bytes():
    """Generation-aware limit: 128 MiB parts (v5e/v6e) -> 64 MiB, 64 MiB (v7x) -> 32 MiB."""
    cap = 64 * 1024 * 1024
    try:
        info = pltpu.get_tpu_info()
        cap = int(getattr(info, "vmem_capacity_bytes", cap) or cap)
    except Exception:
        pass
    return cap, int(min(cap // 2, 100 * 1024 * 1024))


def _vmem_estimate(tq, t_text_p, n_att, ck, act_bytes):
    """Rough resident-VMEM estimate per grid step (double-buffered blocks included)."""
    return (
        2 * 2 * t_text_p * n_att * act_bytes      # kp, vp blocks (double-buffered)
        + 2 * tq * n_att * act_bytes              # qp block
        + 2 * tq * n_att * 4                      # ctx out block
        + 2 * tq * t_text_p * 4                   # attn out block
        + tq * t_text_p * 4                       # scores scratch
        + tq * ck * n_att * (3 * act_bytes + 4)   # per-chunk tanh temporaries (margin)
    )


def _pick_query_tile(t_mel, t_text_p, n_att, ck, act_bytes, budget):
    cap = min(128, _round_up(t_mel, 8))
    for tq in range(cap, 7, -8):
        if _vmem_estimate(tq, t_text_p, n_att, ck, act_bytes) <= budget:
            return tq
    return 8


def _attention_kernel(qp_ref, kp_ref, vp_ref, vw_ref, ctx_ref, attn_ref, s_ref, *,
                      n_keys, key_chunk, num_chunks):
    # Blocks: qp (1, tq, n_att), kp/vp (1, T_text_p, n_att) in the streaming dtype,
    # vw (1, n_att) already pre-scaled by 1/temperature.
    qp = qp_ref[0]                       # (tq, n_att)
    vw = vw_ref[...]                     # (1, n_att)

    # In-kernel key-chunk loop: only a (tq, key_chunk, n_att) tanh working set is
    # live at a time (instead of the full (tq, T_text_p, n_att) broadcast), so VMEM
    # stays bounded and tq stays large regardless of T_text.  Add + tanh + weighting
    # run in the streaming dtype (packed bf16 on v6e/v7x); the score reduction and
    # everything downstream stay in f32.
    def chunk_body(c, carry):
        off = pl.multiple_of(c * key_chunk, key_chunk)
        kc = kp_ref[0, pl.ds(off, key_chunk), :]                  # (ck, n_att)
        t = jnp.tanh(qp[:, None, :] + kc[None, :, :])             # (tq, ck, n_att) EUP
        # d-reduction: VPU mul + lane reduce with f32 accumulation.  (An MXU
        # contraction against vw.T was considered but the single EUP doing
        # tq*ck*n_att tanh ops is the binding unit, so this stays on VPU/XLU.)
        sc = jnp.sum((t * vw[None, :, :]).astype(jnp.float32), axis=-1)   # (tq, ck)
        s_ref[:, pl.ds(off, key_chunk)] = sc
        return carry

    lax.fori_loop(0, num_chunks, chunk_body, 0, unroll=(num_chunks <= 4))

    scores = s_ref[...]                                           # (tq, T_text_p) f32
    # Mask padded key columns (T_text rounded up to a lane-dense multiple of 128).
    if n_keys < scores.shape[-1]:
        col = lax.broadcasted_iota(jnp.int32, scores.shape, 1)
        scores = jnp.where(col < n_keys, scores, -1e30)

    # Numerically stable softmax over the text axis, f32 statistics.
    m = jnp.max(scores, axis=-1, keepdims=True)
    e = jnp.exp(scores - m)
    denom = jnp.sum(e, axis=-1, keepdims=True)
    attn = e * (1.0 / denom)             # exact reciprocal: denom is only (tq, 1)

    attn_ref[0] = attn                   # lane-dense store (T_text_p % 128 == 0)
    # context = attn @ value_projection on the MXU (bf16 inputs on v6e/v7x, f32 acc).
    ctx_ref[0] = jnp.dot(attn.astype(vp_ref.dtype), vp_ref[0],
                         preferred_element_type=jnp.float32)


def _project(queries, keys, values, wq_t, wk_t, wv_t, out_dtype):
    """Bias-free projections hoisted to XLA; fuses the (T, B, C)->(B, T, n_att) transpose.
    DEFAULT MXU precision (single bf16 pass) is consistent with the kernel accuracy."""
    def proj(x, w):
        y = jnp.einsum("tbc,cd->btd", x, w, preferred_element_type=jnp.float32)
        return y.astype(out_dtype)
    return proj(queries, wq_t), proj(keys, wk_t), proj(values, wv_t)


@functools.partial(jax.jit, static_argnames=("temperature", "compute_dtype"))
def flowtron_attention(queries, keys, values, wq_t, wk_t, wv_t, v_row,
                       temperature=1.0, compute_dtype=None):
    """Pallas implementation of flowtron.Attention.forward (attn=None, mask=None path).

    Args (torch layout):
      queries: (T_mel, B, n_mel)   f32
      keys:    (T_text, B, d_kv)   f32
      values:  (T_text, B, d_kv)   f32
      wq_t:    (n_mel, n_att)   query weight, transposed (torch weight.T)
      wk_t:    (d_kv, n_att)    key weight, transposed
      wv_t:    (d_kv, n_att)    value weight, transposed
      v_row:   (1, n_att)       score-projection weight (torch shape (1, n_att))

    Returns:
      output: (B, n_att, T_mel)
      attn:   (B, T_mel, T_text)
    """
    if compute_dtype is None:
        compute_dtype = _default_compute_dtype()
    act_dtype = jnp.dtype(compute_dtype)
    act_bytes = act_dtype.itemsize

    qp, kp, vp = _project(queries, keys, values, wq_t, wk_t, wv_t, act_dtype)
    B, T_mel, n_att = qp.shape
    _, T_text, _ = kp.shape

    # Fold 1/temperature into the score projection (removes a per-step VPU multiply).
    vw = (v_row.astype(jnp.float32) * (1.0 / float(temperature))).astype(act_dtype)

    # Lane-dense key axis: pad to a multiple of 128 (padded keys masked in-kernel).
    T_text_p = _round_up(T_text, 128)
    if T_text_p != T_text:
        kp = jnp.pad(kp, ((0, 0), (0, T_text_p - T_text), (0, 0)))
        vp = jnp.pad(vp, ((0, 0), (0, T_text_p - T_text), (0, 0)))

    # Generation-aware tiling: 128-key chunks, query tile as big as the VMEM budget allows.
    cap, vmem_limit = _vmem_budget_bytes()
    key_chunk = min(128, T_text_p)
    tq = _pick_query_tile(T_mel, T_text_p, n_att, key_chunk, act_bytes,
                          int(vmem_limit * 0.8))
    vmem_limit = int(min(int(cap * 0.9),
                         max(vmem_limit,
                             _vmem_estimate(tq, T_text_p, n_att, key_chunk, act_bytes)
                             + (8 << 20))))

    T_mel_p = _round_up(T_mel, tq)
    if T_mel_p != T_mel:
        qp = jnp.pad(qp, ((0, 0), (0, T_mel_p - T_mel), (0, 0)))

    num_chunks = T_text_p // key_chunk
    kernel = functools.partial(_attention_kernel, n_keys=T_text,
                               key_chunk=key_chunk, num_chunks=num_chunks)

    ctx, attn = pl.pallas_call(
        kernel,
        out_shape=(
            jax.ShapeDtypeStruct((B, T_mel_p, n_att), jnp.float32),
            jax.ShapeDtypeStruct((B, T_mel_p, T_text_p), jnp.float32),
        ),
        grid_spec=pltpu.PrefetchScalarGridSpec(
            num_scalar_prefetch=0,
            grid=(B, T_mel_p // tq),
            in_specs=[
                pl.BlockSpec((1, tq, n_att), lambda b, q: (b, q, 0)),
                # kp / vp: q-invariant index_map -> DMA'd once per batch element.
                pl.BlockSpec((1, T_text_p, n_att), lambda b, q: (b, 0, 0)),
                pl.BlockSpec((1, T_text_p, n_att), lambda b, q: (b, 0, 0)),
                pl.BlockSpec((1, n_att), lambda b, q: (0, 0)),
            ],
            out_specs=[
                pl.BlockSpec((1, tq, n_att), lambda b, q: (b, q, 0)),
                pl.BlockSpec((1, tq, T_text_p), lambda b, q: (b, q, 0)),
            ],
            scratch_shapes=[pltpu.VMEM((tq, T_text_p), jnp.float32)],
        ),
        compiler_params=pltpu.CompilerParams(
            dimension_semantics=("parallel", "parallel"),
            vmem_limit_bytes=vmem_limit),
    )(qp, kp, vp, vw)

    # Drop padding; emit (B, n_att, T_mel) like torch's output.transpose(1, 2).
    output = jnp.transpose(ctx[:, :T_mel, :], (0, 2, 1))
    attn = attn[:, :T_mel, :T_text]
    return output, attn


def _reference(queries, keys, values, wq_t, wk_t, wv_t, v_row, temperature=1.0):
    qp, kp, vp = _project(queries, keys, values, wq_t, wk_t, wv_t, jnp.float32)
    t = jnp.tanh(qp[:, :, None, :] + kp[:, None, :, :])
    scores = jnp.sum(t * v_row[0], axis=-1) / temperature
    attn = jax.nn.softmax(scores, axis=2)
    ctx = jnp.einsum("bqk,bkd->bqd", attn, vp, precision=lax.Precision.HIGHEST)
    return jnp.transpose(ctx, (0, 2, 1)), attn


def _xavier_uniform(key, shape, gain):
    fan_out, fan_in = shape  # torch Linear weight shape: (out, in)
    limit = gain * np.sqrt(6.0 / (fan_in + fan_out))
    return jax.random.uniform(key, shape, jnp.float32, -limit, limit)


if __name__ == "__main__":
    # Module hyperparameters (original sizes), small sequence lengths / batch.
    n_mel_channels = 80
    n_speaker_dim = 128
    n_text_channels = 512
    n_att_channels = 128
    temperature = 1.0
    d_kv = n_text_channels + n_speaker_dim  # 640

    B, T_mel, T_text = 2, 8, 8

    key = jax.random.PRNGKey(0)
    k1, k2, k3, k4, k5, k6, k7 = jax.random.split(key, 7)

    tanh_gain = 5.0 / 3.0  # torch.nn.init.calculate_gain('tanh')
    wq = _xavier_uniform(k1, (n_att_channels, n_mel_channels), tanh_gain)
    wk = _xavier_uniform(k2, (n_att_channels, d_kv), tanh_gain)
    wv = _xavier_uniform(k3, (n_att_channels, d_kv), tanh_gain)
    v_row = _xavier_uniform(k4, (1, n_att_channels), tanh_gain)

    # Inputs in torch layout: (seq, batch, channels)
    queries = jax.random.normal(k5, (T_mel, B, n_mel_channels), jnp.float32)
    keys = jax.random.normal(k6, (T_text, B, d_kv), jnp.float32)
    values = jax.random.normal(k7, (T_text, B, d_kv), jnp.float32)

    # TODO(synk): optional `mask` / precomputed `attn` branches not implemented
    # (only the default attn=None, mask=None forward path is kernelized).
    out_ref, attn_ref = _reference(queries, keys, values, wq.T, wk.T, wv.T, v_row,
                                   temperature=temperature)
    out_ref = np.asarray(jax.block_until_ready(out_ref))
    attn_ref = np.asarray(jax.block_until_ready(attn_ref))

    # 1) Exact-math (f32) path: tight check of chunk loop / masking / softmax logic.
    out32, attn32 = flowtron_attention(queries, keys, values, wq.T, wk.T, wv.T, v_row,
                                       temperature=temperature,
                                       compute_dtype=jnp.float32)
    out32 = jax.block_until_ready(out32)
    attn32 = jax.block_until_ready(attn32)
    assert out32.shape == (B, n_att_channels, T_mel)
    assert attn32.shape == (B, T_mel, T_text)
    np.testing.assert_allclose(np.asarray(out32), out_ref, rtol=1e-2, atol=1e-2)
    np.testing.assert_allclose(np.asarray(attn32), attn_ref, rtol=1e-2, atol=1e-2)

    # 2) Fast path (bf16 streaming on v6e/v7x, f32 on v5e): looser check.
    fast_dtype = _default_compute_dtype()
    out_f, attn_f = flowtron_attention(queries, keys, values, wq.T, wk.T, wv.T, v_row,
                                       temperature=temperature,
                                       compute_dtype=fast_dtype)
    out_f = jax.block_until_ready(out_f)
    attn_f = jax.block_until_ready(attn_f)
    assert out_f.shape == (B, n_att_channels, T_mel)
    assert attn_f.shape == (B, T_mel, T_text)
    np.testing.assert_allclose(np.asarray(out_f), out_ref, rtol=1e-1, atol=1e-1)
    np.testing.assert_allclose(np.asarray(attn_f), attn_ref, rtol=1e-1, atol=1e-1)

    print("KERNEL_OK")
</pallas_src>

<mosaic_0001>
module attributes {stable_mosaic.version = 11 : i64} {
  func.func @_attention_kernel(%arg0: i32, %arg1: i32, %arg2: memref<1x8x128xf32, #tpu.memory_space<vmem>>, %arg3: memref<1x128x128xf32, #tpu.memory_space<vmem>>, %arg4: memref<1x128x128xf32, #tpu.memory_space<vmem>>, %arg5: memref<1x128xf32, #tpu.memory_space<vmem>>, %arg6: memref<1x8x128xf32, #tpu.memory_space<vmem>>, %arg7: memref<1x8x128xf32, #tpu.memory_space<vmem>>, %arg8: memref<8x128xf32, #tpu.memory_space<vmem>>) attributes {dimension_semantics = [#tpu.dimension_semantics<parallel>, #tpu.dimension_semantics<parallel>], iteration_bounds = array<i64: 2, 1>, scalar_prefetch = 0 : i64, scratch_operands = 1 : i64, tpu.core_type = #tpu.core_type<tc>, window_params = [{transform_indices = @transform_0, window_bounds = array<i64: 1, 8, 128>}, {transform_indices = @transform_1, window_bounds = array<i64: 1, 128, 128>}, {transform_indices = @transform_2, window_bounds = array<i64: 1, 128, 128>}, {pipeline_mode = #tpu.pipeline_mode<synchronous>, transform_indices = @transform_3, window_bounds = array<i64: 1, 128>}, {transform_indices = @transform_4, window_bounds = array<i64: 1, 8, 128>}, {transform_indices = @transform_5, window_bounds = array<i64: 1, 8, 128>}]} {
    %c0 = arith.constant 0 : index
    %c0_0 = arith.constant 0 : index
    %c0_1 = arith.constant 0 : index
    %0 = vector.load %arg2[%c0, %c0_0, %c0_1] : memref<1x8x128xf32, #tpu.memory_space<vmem>>, vector<1x8x128xf32>
    %1 = vector.shape_cast %0 : vector<1x8x128xf32> to vector<8x128xf32>
    %c0_2 = arith.constant 0 : index
    %c0_3 = arith.constant 0 : index
    %2 = vector.load %arg5[%c0_2, %c0_3] : memref<1x128xf32, #tpu.memory_space<vmem>>, vector<1x128xf32>
    %c0_i32 = arith.constant 0 : i32
    %c128_i32 = arith.constant 128 : i32
    %3 = arith.muli %c0_i32, %c128_i32 : i32
    %4 = tpu.assume_multiple %3, 128 : i32
    %c0_4 = arith.constant 0 : index
    %5 = arith.index_cast %4 : i32 to index
    %c0_5 = arith.constant 0 : index
    %6 = vector.load %arg3[%c0_4, %5, %c0_5] : memref<1x128x128xf32, #tpu.memory_space<vmem>>, vector<1x128x128xf32>
    %7 = vector.shape_cast %6 : vector<1x128x128xf32> to vector<128x128xf32>
    %8 = vector.shape_cast %1 : vector<8x128xf32> to vector<8x1x128xf32>
    %9 = vector.shape_cast %7 : vector<128x128xf32> to vector<1x128x128xf32>
    %10 = vector.broadcast %8 : vector<8x1x128xf32> to vector<8x128x128xf32>
    %11 = vector.broadcast %9 : vector<1x128x128xf32> to vector<8x128x128xf32>
    %12 = arith.addf %10, %11 : vector<8x128x128xf32>
    %13 = math.tanh %12 : vector<8x128x128xf32>
    %14 = vector.shape_cast %2 : vector<1x128xf32> to vector<1x1x128xf32>
    %15 = vector.broadcast %14 : vector<1x1x128xf32> to vector<8x128x128xf32>
    %16 = arith.mulf %13, %15 : vector<8x128x128xf32>
    %cst = arith.constant dense<0.000000e+00> : vector<8x128xf32>
    %17 = vector.multi_reduction <add>, %16, %cst [2] : vector<8x128x128xf32> to vector<8x128xf32>
    %c0_6 = arith.constant 0 : index
    %18 = arith.index_cast %4 : i32 to index
    %19 = vector.load %arg8[%c0_6, %18] : memref<8x128xf32, #tpu.memory_space<vmem>>, vector<8x128xf32>
    tpu.vector_store %arg8[%c0_6, %18], %17 {strides = array<i32>} : memref<8x128xf32, #tpu.memory_space<vmem>>, vector<8x128xf32>,
    %c1_i32 = arith.constant 1 : i32
    %c0_7 = arith.constant 0 : index
    %c0_8 = arith.constant 0 : index
    %20 = vector.load %arg8[%c0_7, %c0_8] : memref<8x128xf32, #tpu.memory_space<vmem>>, vector<8x128xf32>
    %21 = tpu.iota {dimensions = array<i32: 1>} : vector<8x128xi32>
    %c8_i32 = arith.constant 8 : i32
    %22 = vector.broadcast %c8_i32 : i32 to vector<8x128xi32>
    %23 = arith.cmpi slt, %21, %22 : vector<8x128xi32>
    %cst_9 = arith.constant -1.000000e+30 : f32
    %24 = vector.broadcast %cst_9 : f32 to vector<8x128xf32>
    %25 = arith.select %23, %20, %24 : vector<8x128xi1>, vector<8x128xf32>
    %cst_10 = arith.constant dense<0xFF800000> : vector<8xf32>
    %26 = vector.multi_reduction <maximumf>, %25, %cst_10 [1] : vector<8x128xf32> to vector<8xf32>
    %27 = vector.shape_cast %26 : vector<8xf32> to vector<8x1xf32>
    %28 = vector.broadcast %27 : vector<8x1xf32> to vector<8x128xf32>
    %29 = arith.subf %25, %28 : vector<8x128xf32>
    %30 = math.exp %29 : vector<8x128xf32>
    %cst_11 = arith.constant dense<0.000000e+00> : vector<8xf32>
    %31 = vector.multi_reduction <add>, %30, %cst_11 [1] : vector<8x128xf32> to vector<8xf32>
    %32 = vector.shape_cast %31 : vector<8xf32> to vector<8x1xf32>
    %cst_12 = arith.constant 1.000000e+00 : f32
    %33 = vector.broadcast %cst_12 : f32 to vector<8x1xf32>
    %34 = arith.divf %33, %32 : vector<8x1xf32>
    %35 = vector.broadcast %34 : vector<8x1xf32> to vector<8x128xf32>
    %36 = arith.mulf %30, %35 : vector<8x128xf32>
    %c0_13 = arith.constant 0 : index
    %c0_14 = arith.constant 0 : index
    %c0_15 = arith.constant 0 : index
    %37 = vector.load %arg7[%c0_13, %c0_14, %c0_15] : memref<1x8x128xf32, #tpu.memory_space<vmem>>, vector<1x8x128xf32>
    %38 = vector.shape_cast %37 : vector<1x8x128xf32> to vector<8x128xf32>
    %39 = vector.shape_cast %36 : vector<8x128xf32> to vector<1x8x128xf32>
    tpu.vector_store %arg7[%c0_13, %c0_14, %c0_15], %39 {strides = array<i32>} : memref<1x8x128xf32, #tpu.memory_space<vmem>>, vector<1x8x128xf32>,
    %c0_16 = arith.constant 0 : index
    %c0_17 = arith.constant 0 : index
    %c0_18 = arith.constant 0 : index
    %40 = vector.load %arg4[%c0_16, %c0_17, %c0_18] : memref<1x128x128xf32, #tpu.memory_space<vmem>>, vector<1x128x128xf32>
    %41 = vector.shape_cast %40 : vector<1x128x128xf32> to vector<128x128xf32>
    %cst_19 = arith.constant dense<0.000000e+00> : vector<8x128xf32>
    %42 = tpu.matmul %36, %41, %cst_19 {dimension_numbers = #tpu.dot_dimension_numbers<[1], [0], [0], [1], [0, 0, 1, 1], [], []>} : vector<8x128xf32>, vector<128x128xf32>, vector<8x128xf32> -> vector<8x128xf32>
    %c0_20 = arith.constant 0 : index
    %c0_21 = arith.constant 0 : index
    %c0_22 = arith.constant 0 : index
    %43 = vector.load %arg6[%c0_20, %c0_21, %c0_22] : memref<1x8x128xf32, #tpu.memory_space<vmem>>, vector<1x8x128xf32>
    %44 = vector.shape_cast %43 : vector<1x8x128xf32> to vector<8x128xf32>
    %45 = vector.shape_cast %42 : vector<8x128xf32> to vector<1x8x128xf32>
    tpu.vector_store %arg6[%c0_20, %c0_21, %c0_22], %45 {strides = array<i32>} : memref<1x8x128xf32, #tpu.memory_space<vmem>>, vector<1x8x128xf32>,
    return
  }
  func.func @transform_0(%arg0: i32, %arg1: i32) -> (i32, i32, i32) {
    %c0_i32 = arith.constant 0 : i32
    %c0_i32_0 = arith.constant 0 : i32
    return %arg0, %arg1, %c0_i32 : i32, i32, i32
  }
  func.func @transform_1(%arg0: i32, %arg1: i32) -> (i32, i32, i32) {
    %c0_i32 = arith.constant 0 : i32
    %c0_i32_0 = arith.constant 0 : i32
    %c0_i32_1 = arith.constant 0 : i32
    return %arg0, %c0_i32, %c0_i32_0 : i32, i32, i32
  }
  func.func @transform_2(%arg0: i32, %arg1: i32) -> (i32, i32, i32) {
    %c0_i32 = arith.constant 0 : i32
    %c0_i32_0 = arith.constant 0 : i32
    %c0_i32_1 = arith.constant 0 : i32
    return %arg0, %c0_i32, %c0_i32_0 : i32, i32, i32
  }
  func.func @transform_3(%arg0: i32, %arg1: i32) -> (i32, i32) {
    %c0_i32 = arith.constant 0 : i32
    %c0_i32_0 = arith.constant 0 : i32
    %c0_i32_1 = arith.constant 0 : i32
    return %c0_i32, %c0_i32_0 : i32, i32
  }
  func.func @transform_4(%arg0: i32, %arg1: i32) -> (i32, i32, i32) {
    %c0_i32 = arith.constant 0 : i32
    %c0_i32_0 = arith.constant 0 : i32
    return %arg0, %arg1, %c0_i32 : i32, i32, i32
  }
  func.func @transform_5(%arg0: i32, %arg1: i32) -> (i32, i32, i32) {
    %c0_i32 = arith.constant 0 : i32
    %c0_i32_0 = arith.constant 0 : i32
    return %arg0, %arg1, %c0_i32 : i32, i32, i32
  }
}

</mosaic_0001>

<llo_original>
// kernel: flowtron_attention.1
$region0: #{flowtron_attention.1}
  #allocation0 [shape = 'u32[]', space=smem, size = 0x4, offset = 0x4, fixed_abs, tag = 'smem constant byte address 0x4 - core index']
  #allocation1 [shape = 'u32[72,128]{1,0:T(1,128)}', space=vmem, size = 0x9000, scoped, tag = 'internal scratch']
  #allocation2 [shape = 'f32[8,128]{1,0:T(8,128)}', space=vmem, size = 0x1000, scoped, tag = 'scratch operand']
  %s0 = inlined_call_operand.vmem [shape: f32[2,8,128], index: 0, kind: input, shape index: {}]
  %s1 = inlined_call_operand.vmem [shape: f32[2,128,128], index: 1, kind: input, shape index: {}]
  %s2 = inlined_call_operand.vmem [shape: f32[2,128,128], index: 2, kind: input, shape index: {}]
  %s3 = inlined_call_operand.vmem [shape: f32[1,128], index: 3, kind: input, shape index: {}]
  %s4 = inlined_call_operand.hbm [shape: f32[2,8,128], index: 4, kind: output, shape index: {0}]
  %s5 = inlined_call_operand.hbm [shape: f32[2,8,128], index: 5, kind: output, shape index: {1}]
  %6 = xla_tuple %s4, %s5
  %s7 = sld [smem:[#allocation0]]
  $region57: #{flowtron_attention.1} parent=0
    _
  %s9 = ssub.s32 1, %s7
  %s10 = scalar_select 0, %s9, %s7
  $region1: #{flowtron_attention.1} parent=0
    #allocation3 [shape = 'u8[8192]{0}', space=vmem, size = 0x2000, scoped, tag = 'output window, operand 0']
    #allocation4 [shape = 's32[2]{0}', space=sflag, size = 0x8, scoped, tag = 'scoped memory for flowtron_attention.1']
    #allocation5 [shape = 'u8[8192]{0}', space=vmem, size = 0x2000, scoped, tag = 'output window, operand 1']
    #allocation6 [shape = 's32[2]{0}', space=sflag, size = 0x8, scoped, tag = 'scoped memory for flowtron_attention.1']
    %11 = vsyncpa [#allocation4], 0
    %s12 = scalar_lea.sflag [#allocation4], 1
    %13 = vsyncpa %s12, 0
    %14 = vsyncpa [#allocation6], 0
    %s15 = scalar_lea.sflag [#allocation6], 1
    %16 = vsyncpa %s15, 0
    loop: start=0, step=1, limit=4
    $region2: #{flowtron_attention.1} parent=1 // loop_pre_header
      _
    $region3: #{flowtron_attention.1} parent=1 // loop_header
      %s18 = sphi 0, %s22
      %p19 = scmp.ge.s32.totalorder %s18, 4
      %s25 = sphi 0, %s37
      %s26 = sphi 0, %s33
      %s27 = sphi 0, %s25
      %s28 = sphi 0, %s26
      %s29 = sphi 0, %s27
      %s30 = sphi 0, %s28
      %s42 = sphi 0, %s44
      %s45 = sphi 0, %s42
      %s46 = sphi 0, %s45
      %s62 = sphi 0, %s46
      %s68 = sphi 0, %s70
      %s71 = sphi 0, %s68
      %s72 = sphi 0, %s71
      %s88 = sphi 0, %s72
      %s94 = sphi 0, %s96
      %s97 = sphi 0, %s94
      %s98 = sphi 0, %s97
      %s114 = sphi 0, %s98
      %s118 = sphi 0, %s118
      %s120 = sphi 0, %s118
      %s121 = sphi 0, %s120
      %s135 = sphi 0, %s121
      %s143 = sphi 0, %s145
      %s146 = sphi 0, %s143
      %s147 = sphi 0, %s146
      %s163 = sphi 0, %s147
      %s171 = sphi 0, %s173
      %s174 = sphi 0, %s171
      %s175 = sphi 0, %s174
      %s191 = sphi 0, %s175
    $region4: #{flowtron_attention.1} parent=1 // loop_header_branch
      %21 = sbr.rel (%p19) target = $region8
    $region5: #{flowtron_attention.1} parent=1 // loop_body
      %s23 = ssub.s32 %s18, 1
      %s24 = ssub.s32 %s18, 2
      %s31 = sadd.s32 1, %s26
      %p32 = scmp.ge.s32.totalorder %s31, 1
      %s33 = scalar_select %p32, 0, %s31
      %s34 = sadd.s32 1, %s25
      %s35 = scalar_select %p32, %s34, %s25
      %p36 = scmp.ge.s32.totalorder %s35, 2
      %s37 = scalar_select %p36, 0, %s35
      %s38 = ssub.s32 %s25, %s37
      %s39 = ssub.s32 %s26, %s33
      %s40 = sor.u32 %s38, %s39
      %p41 = scmp.eq.s32.totalorder %s40, 0
      %s43 = sadd.s32 %s42, 1
      %s44 = scalar_select %p41, %s42, %s43
      %p47 = pneg %p41
      %p48 = scmp.eq.s32.totalorder %s18, 1
      %p49 = por %p47, %p48
      %p50 = scmp.ne.s32.totalorder %s42, %s45
      %p51 = scmp.eq.s32.totalorder %s18, 0
      %p52 = por %p50, %p51
      %p53 = scmp.ne.s32.totalorder %s42, %s45
      %p54 = scmp.eq.s32.totalorder %s23, 1
      %p55 = por %p53, %p54
      %p56 = scmp.ne.s32.totalorder %s45, %s46
      %p57 = scmp.eq.s32.totalorder %s23, 0
      %p58 = por %p56, %p57
      %p59 = scmp.ne.s32.totalorder %s45, %s46
      %p60 = scmp.eq.s32.totalorder %s24, 1
      %p61 = por %p59, %p60
      %p63 = scmp.ne.s32.totalorder %s46, %s62
      %p64 = scmp.eq.s32.totalorder %s24, 0
      %p65 = por %p63, %p64
      %s66 = ssub.s32 %s25, %s37
      %p67 = scmp.eq.s32.totalorder %s66, 0
      %s69 = sadd.s32 %s68, 1
      %s70 = scalar_select %p67, %s68, %s69
      %p73 = pneg %p67
      %p74 = scmp.eq.s32.totalorder %s18, 1
      %p75 = por %p73, %p74
      %p76 = scmp.ne.s32.totalorder %s68, %s71
      %p77 = scmp.eq.s32.totalorder %s18, 0
      %p78 = por %p76, %p77
      %p79 = scmp.ne.s32.totalorder %s68, %s71
      %p80 = scmp.eq.s32.totalorder %s23, 1
      %p81 = por %p79, %p80
      %p82 = scmp.ne.s32.totalorder %s71, %s72
      %p83 = scmp.eq.s32.totalorder %s23, 0
      %p84 = por %p82, %p83
      %p85 = scmp.ne.s32.totalorder %s71, %s72
      %p86 = scmp.eq.s32.totalorder %s24, 1
      %p87 = por %p85, %p86
      %p89 = scmp.ne.s32.totalorder %s72, %s88
      %p90 = scmp.eq.s32.totalorder %s24, 0
      %p91 = por %p89, %p90
      %s92 = ssub.s32 %s25, %s37
      %p93 = scmp.eq.s32.totalorder %s92, 0
      %s95 = sadd.s32 %s94, 1
      %s96 = scalar_select %p93, %s94, %s95
      %p99 = pneg %p93
      %p100 = scmp.eq.s32.totalorder %s18, 1
      %p101 = por %p99, %p100
      %p102 = scmp.ne.s32.totalorder %s94, %s97
      %p103 = scmp.eq.s32.totalorder %s18, 0
      %p104 = por %p102, %p103
      %p105 = scmp.ne.s32.totalorder %s94, %s97
      %p106 = scmp.eq.s32.totalorder %s23, 1
      %p107 = por %p105, %p106
      %p108 = scmp.ne.s32.totalorder %s97, %s98
      %p109 = scmp.eq.s32.totalorder %s23, 0
      %p110 = por %p108, %p109
      %p111 = scmp.ne.s32.totalorder %s97, %s98
      %p112 = scmp.eq.s32.totalorder %s24, 1
      %p113 = por %p111, %p112
      %p115 = scmp.ne.s32.totalorder %s98, %s114
      %p116 = scmp.eq.s32.totalorder %s24, 0
      %p117 = por %p115, %p116
      %s119 = sadd.s32 %s118, 1
      %p122 = scmp.eq.s32.totalorder %s18, 1
      %p123 = scmp.ne.s32.totalorder %s118, %s120
      %p124 = scmp.eq.s32.totalorder %s18, 0
      %p125 = por %p123, %p124
      %p126 = scmp.ne.s32.totalorder %s118, %s120
      %p127 = scmp.eq.s32.totalorder %s23, 1
      %p128 = por %p126, %p127
      %p129 = scmp.ne.s32.totalorder %s120, %s121
      %p130 = scmp.eq.s32.totalorder %s23, 0
      %p131 = por %p129, %p130
      %p132 = scmp.ne.s32.totalorder %s120, %s121
      %p133 = scmp.eq.s32.totalorder %s24, 1
      %p134 = por %p132, %p133
      %p136 = scmp.ne.s32.totalorder %s121, %s135
      %p137 = scmp.eq.s32.totalorder %s24, 0
      %p138 = por %p136, %p137
      %s139 = ssub.s32 %s25, %s37
      %s140 = ssub.s32 %s26, %s33
      %s141 = sor.u32 %s139, %s140
      %p142 = scmp.eq.s32.totalorder %s141, 0
      %s144 = sadd.s32 %s143, 1
      %s145 = scalar_select %p142, %s143, %s144
      %p148 = pneg %p142
      %p149 = scmp.eq.s32.totalorder %s18, 1
      %p150 = por %p148, %p149
      %p151 = scmp.ne.s32.totalorder %s143, %s146
      %p152 = scmp.eq.s32.totalorder %s18, 0
      %p153 = por %p151, %p152
      %p154 = scmp.ne.s32.totalorder %s143, %s146
      %p155 = scmp.eq.s32.totalorder %s23, 1
      %p156 = por %p154, %p155
      %p157 = scmp.ne.s32.totalorder %s146, %s147
      %p158 = scmp.eq.s32.totalorder %s23, 0
      %p159 = por %p157, %p158
      %p160 = scmp.ne.s32.totalorder %s146, %s147
      %p161 = scmp.eq.s32.totalorder %s24, 1
      %p162 = por %p160, %p161
      %p164 = scmp.ne.s32.totalorder %s147, %s163
      %p165 = scmp.eq.s32.totalorder %s24, 0
      %p166 = por %p164, %p165
      %s167 = ssub.s32 %s25, %s37
      %s168 = ssub.s32 %s26, %s33
      %s169 = sor.u32 %s167, %s168
      %p170 = scmp.eq.s32.totalorder %s169, 0
      %s172 = sadd.s32 %s171, 1
      %s173 = scalar_select %p170, %s171, %s172
      %p176 = pneg %p170
      %p177 = scmp.eq.s32.totalorder %s18, 1
      %p178 = por %p176, %p177
      %p179 = scmp.ne.s32.totalorder %s171, %s174
      %p180 = scmp.eq.s32.totalorder %s18, 0
      %p181 = por %p179, %p180
      %p182 = scmp.ne.s32.totalorder %s171, %s174
      %p183 = scmp.eq.s32.totalorder %s23, 1
      %p184 = por %p182, %p183
      %p185 = scmp.ne.s32.totalorder %s174, %s175
      %p186 = scmp.eq.s32.totalorder %s23, 0
      %p187 = por %p185, %p186
      %p188 = scmp.ne.s32.totalorder %s174, %s175
      %p189 = scmp.eq.s32.totalorder %s24, 1
      %p190 = por %p188, %p189
      %p192 = scmp.ne.s32.totalorder %s175, %s191
      %p193 = scmp.eq.s32.totalorder %s24, 0
      %p194 = por %p192, %p193
      %p195 = scmp.le.s32.totalorder 1, %s18
      %p196 = scmp.lt.s32.totalorder %s18, 3
      %p197 = pnand %p195, %p196
      %p198 = pneg %p197
      // Predicated region
      $region9: #{flowtron_attention.1} parent=5 // pred_check
        _
      $region10: #{flowtron_attention.1} parent=5 // pred_check_branch
        %200 = sbr.rel (%p197) target = $region12
      $region11: #{flowtron_attention.1} parent=5 // pred_region
        %s201 = ssub.s32 %s18, 1
        // Predicated region
        $region13: #{flowtron_attention.1} parent=11 // pred_check
          %p202 = pneg %p131
        $region14: #{flowtron_attention.1} parent=11 // pred_check_branch
          %204 = sbr.rel (%p202) target = $region16
        $region15: #{flowtron_attention.1} parent=11 // pred_region
          _
        $region16: #{flowtron_attention.1} parent=11 // pred_fallthru
          _
      $region12: #{flowtron_attention.1} parent=5 // pred_fallthru
        _
      %p205 = scmp.lt.s32.totalorder %s18, 2
      // Predicated region
      $region17: #{flowtron_attention.1} parent=5 // pred_check
        %p206 = pneg %p205
      $region18: #{flowtron_attention.1} parent=5 // pred_check_branch
        %208 = sbr.rel (%p206) target = $region20
      $region19: #{flowtron_attention.1} parent=5 // pred_region
        // Predicated region
        $region21: #{flowtron_attention.1} parent=19 // pred_check
          %p209 = pneg %p52
        $region22: #{flowtron_attention.1} parent=19 // pred_check_branch
          %211 = sbr.rel (%p209) target = $region24
        $region23: #{flowtron_attention.1} parent=19 // pred_region
          %p212 = scmp.lt.s32.totalorder %s25, 1
          %s213 = scalar_select %p212, %s25, 1
          %p214 = scmp.lt.s32.totalorder %s26, 0
          %s215 = scalar_select %p214, %s26, 0
          %s216 = sadd.s32 %s215, %s213
          %s217 = smul.addr %s216, 8
          %s218 = scalar_lea.vmem %s0, %s217
        $region24: #{flowtron_attention.1} parent=19 // pred_fallthru
          _
        // Predicated region
        $region25: #{flowtron_attention.1} parent=19 // pred_check
          %p219 = pneg %p78
        $region26: #{flowtron_attention.1} parent=19 // pred_check_branch
          %221 = sbr.rel (%p219) target = $region28
        $region27: #{flowtron_attention.1} parent=19 // pred_region
          %p222 = scmp.lt.s32.totalorder %s25, 1
          %s223 = scalar_select %p222, %s25, 1
          %s224 = smul.addr %s223, 16
          %s225 = smul.addr %s224, 8
          %s226 = scalar_lea.vmem %s1, %s225
        $region28: #{flowtron_attention.1} parent=19 // pred_fallthru
          _
        // Predicated region
        $region29: #{flowtron_attention.1} parent=19 // pred_check
          %p227 = pneg %p104
        $region30: #{flowtron_attention.1} parent=19 // pred_check_branch
          %229 = sbr.rel (%p227) target = $region32
        $region31: #{flowtron_attention.1} parent=19 // pred_region
          %p230 = scmp.lt.s32.totalorder %s25, 1
          %s231 = scalar_select %p230, %s25, 1
          %s232 = smul.addr %s231, 16
          %s233 = smul.addr %s232, 8
          %s234 = scalar_lea.vmem %s2, %s233
        $region32: #{flowtron_attention.1} parent=19 // pred_fallthru
          _
      $region20: #{flowtron_attention.1} parent=5 // pred_fallthru
        _
      %p235 = scmp.le.s32.totalorder 1, %s18
      %p236 = scmp.lt.s32.totalorder %s18, 3
      %p237 = pnand %p235, %p236
      %p238 = pneg %p237
      // Predicated region
      $region33: #{flowtron_attention.1} parent=5 // pred_check
        _
      $region34: #{flowtron_attention.1} parent=5 // pred_check_branch
        %240 = sbr.rel (%p237) target = $region36
      $region35: #{flowtron_attention.1} parent=5 // pred_region
        %s241 = ssub.s32 %s18, 1
        %p242 = scmp.lt.s32.totalorder %s27, 1
        %s243 = scalar_select %p242, %s27, 1
        %p244 = scmp.lt.s32.totalorder %s28, 0
        %s245 = scalar_select %p244, %s28, 0
        %s246 = sadd.s32 %s245, %s243
        %s247 = smul.addr %s246, 8
        %s248 = scalar_lea.vmem %s0, %s247
        %p249 = pneg %p58
        %p250 = pneg %p55
        %p251 = scmp.lt.s32.totalorder %s27, 1
        %s252 = scalar_select %p251, %s27, 1
        %s253 = smul.addr %s252, 16
        %s254 = smul.addr %s253, 8
        %s255 = scalar_lea.vmem %s1, %s254
        %p256 = pneg %p84
        %p257 = pneg %p81
        %p258 = scmp.lt.s32.totalorder %s27, 1
        %s259 = scalar_select %p258, %s27, 1
        %s260 = smul.addr %s259, 16
        %s261 = smul.addr %s260, 8
        %s262 = scalar_lea.vmem %s2, %s261
        %p263 = pneg %p110
        %p264 = pneg %p107
        %p265 = pneg %p131
        %p266 = pneg %p128
        %p267 = pneg %p159
        %p268 = pneg %p156
        %s269 = sand.u32 %s146, 1
        %s270 = scalar_lea.sflag [#allocation4], %s269
        %s271 = sand.u32 %s146, 1
        %s272 = smul.addr %s271, 8
        %s273 = scalar_lea.vmem [#allocation3], %s272
        %p274 = pneg %p187
        %p275 = pneg %p184
        %s276 = sand.u32 %s174, 1
        %s277 = scalar_lea.sflag [#allocation6], %s276
        %s278 = sand.u32 %s174, 1
        %s279 = smul.addr %s278, 8
        %s280 = scalar_lea.vmem [#allocation5], %s279
        %p281 = scmp.lt.s32.totalorder %s27, 1
        %s282 = scalar_select %p281, %s27, 1
        %p283 = scmp.lt.s32.totalorder %s28, 0
        %s284 = scalar_select %p283, %s28, 0
        %s285 = sadd.s32 %s284, %s282
        %s286 = smul.addr %s285, 8
        %s287 = scalar_lea.vmem %s0, %s286
        %p288 = scmp.lt.s32.totalorder %s27, 1
        %s289 = scalar_select %p288, %s27, 1
        %s290 = smul.addr %s289, 16
        %s291 = smul.addr %s290, 8
        %s292 = scalar_lea.vmem %s1, %s291
        %p293 = scmp.lt.s32.totalorder %s27, 1
        %s294 = scalar_select %p293, %s27, 1
        %s295 = smul.addr %s294, 16
        %s296 = smul.addr %s295, 8
        %s297 = scalar_lea.vmem %s2, %s296
        %v298 = vld [vmem:[%s287] sm:$0xff]
        %v299 = vld [vmem:[%s3] sm:$0x1]
        %v300 = vld [vmem:[%s292] sm:$0xff]
        %v301 = vld [vmem:[%s292 + $0x8] sm:$0xff]
        %v302 = vld [vmem:[%s292 + $0x10] sm:$0xff]
        %v303 = vld [vmem:[%s292 + $0x18] sm:$0xff]
        %v304 = vld [vmem:[%s292 + $0x20] sm:$0xff]
        %v305 = vld [vmem:[%s292 + $0x28] sm:$0xff]
        %v306 = vld [vmem:[%s292 + $0x30] sm:$0xff]
        %v307 = vld [vmem:[%s292 + $0x38] sm:$0xff]
        %v308 = vld [vmem:[%s292 + $0x40] sm:$0xff]
        %v309 = vld [vmem:[%s292 + $0x48] sm:$0xff]
        %v310 = vld [vmem:[%s292 + $0x50] sm:$0xff]
        %v311 = vld [vmem:[%s292 + $0x58] sm:$0xff]
        %v312 = vld [vmem:[%s292 + $0x60] sm:$0xff]
        %v313 = vld [vmem:[%s292 + $0x68] sm:$0xff]
        %v314 = vld [vmem:[%s292 + $0x70] sm:$0xff]
        %v315 = vld [vmem:[%s292 + $0x78] sm:$0xff]
        %v317 = vrot.slane %v298, 1
        %v318 = vrot.slane %v298, 2
        %v319 = vrot.slane %v298, 3
        %v320 = vrot.slane %v298, 4
        %v321 = vrot.slane %v298, 5
        %v322 = vrot.slane %v298, 6
        %v323 = vrot.slane %v298, 7
        %v324 = vperm.slane %v298, 0
        %v325 = vperm.slane %v317, 0
        %v326 = vperm.slane %v318, 0
        %v327 = vperm.slane %v319, 0
        %v328 = vperm.slane %v320, 0
        %v329 = vperm.slane %v321, 0
        %v330 = vperm.slane %v322, 0
        %v331 = vperm.slane %v323, 0
        %v340 = vadd.f32 %v324, %v300
        %v341 = vadd.f32 %v324, %v301
        %v342 = vadd.f32 %v324, %v302
        %v343 = vadd.f32 %v324, %v303
        %v344 = vadd.f32 %v324, %v304
        %v345 = vadd.f32 %v324, %v305
        %v346 = vadd.f32 %v324, %v306
        %v347 = vadd.f32 %v324, %v307
        %v348 = vadd.f32 %v324, %v308
        %v349 = vadd.f32 %v324, %v309
        %v350 = vadd.f32 %v324, %v310
        %v351 = vadd.f32 %v324, %v311
        %v352 = vadd.f32 %v324, %v312
        %v353 = vadd.f32 %v324, %v313
        %v354 = vadd.f32 %v324, %v314
        %v355 = vadd.f32 %v324, %v315
        %v356 = vadd.f32 %v325, %v300
        %v357 = vadd.f32 %v325, %v301
        %v358 = vadd.f32 %v325, %v302
        %v359 = vadd.f32 %v325, %v303
        %v360 = vadd.f32 %v325, %v304
        %v361 = vadd.f32 %v325, %v305
        %v362 = vadd.f32 %v325, %v306
        %v363 = vadd.f32 %v325, %v307
        %v364 = vadd.f32 %v325, %v308
        %v365 = vadd.f32 %v325, %v309
        %v366 = vadd.f32 %v325, %v310
        %v367 = vadd.f32 %v325, %v311
        %v368 = vadd.f32 %v325, %v312
        %v369 = vadd.f32 %v325, %v313
        %v370 = vadd.f32 %v325, %v314
        %v371 = vadd.f32 %v325, %v315
        %v372 = vadd.f32 %v326, %v300
        %v373 = vadd.f32 %v326, %v301
        %v374 = vadd.f32 %v326, %v302
        %v375 = vadd.f32 %v326, %v303
        %v376 = vadd.f32 %v326, %v304
        %v377 = vadd.f32 %v326, %v305
        %v378 = vadd.f32 %v326, %v306
        %v379 = vadd.f32 %v326, %v307
        %v380 = vadd.f32 %v326, %v308
        %v381 = vadd.f32 %v326, %v309
        %v382 = vadd.f32 %v326, %v310
        %v383 = vadd.f32 %v326, %v311
        %v384 = vadd.f32 %v326, %v312
        %v385 = vadd.f32 %v326, %v313
        %v386 = vadd.f32 %v326, %v314
        %v387 = vadd.f32 %v326, %v315
        %v388 = vadd.f32 %v327, %v300
        %v389 = vadd.f32 %v327, %v301
        %v390 = vadd.f32 %v327, %v302
        %v391 = vadd.f32 %v327, %v303
        %v392 = vadd.f32 %v327, %v304
        %v393 = vadd.f32 %v327, %v305
        %v394 = vadd.f32 %v327, %v306
        %v395 = vadd.f32 %v327, %v307
        %v396 = vadd.f32 %v327, %v308
        %v397 = vadd.f32 %v327, %v309
        %v398 = vadd.f32 %v327, %v310
        %v399 = vadd.f32 %v327, %v311
        %v400 = vadd.f32 %v327, %v312
        %v401 = vadd.f32 %v327, %v313
        %v402 = vadd.f32 %v327, %v314
        %v403 = vadd.f32 %v327, %v315
        %v404 = vadd.f32 %v328, %v300
        %v405 = vadd.f32 %v328, %v301
        %v406 = vadd.f32 %v328, %v302
        %v407 = vadd.f32 %v328, %v303
        %v408 = vadd.f32 %v328, %v304
        %v409 = vadd.f32 %v328, %v305
        %v410 = vadd.f32 %v328, %v306
        %v411 = vadd.f32 %v328, %v307
        %v412 = vadd.f32 %v328, %v308
        %v413 = vadd.f32 %v328, %v309
        %v414 = vadd.f32 %v328, %v310
        %v415 = vadd.f32 %v328, %v311
        %v416 = vadd.f32 %v328, %v312
        %v417 = vadd.f32 %v328, %v313
        %v418 = vadd.f32 %v328, %v314
        %v419 = vadd.f32 %v328, %v315
        %v420 = vadd.f32 %v329, %v300
        %v421 = vadd.f32 %v329, %v301
        %v422 = vadd.f32 %v329, %v302
        %v423 = vadd.f32 %v329, %v303
        %v424 = vadd.f32 %v329, %v304
        %v425 = vadd.f32 %v329, %v305
        %v426 = vadd.f32 %v329, %v306
        %v427 = vadd.f32 %v329, %v307
        %v428 = vadd.f32 %v329, %v308
        %v429 = vadd.f32 %v329, %v309
        %v430 = vadd.f32 %v329, %v310
        %v431 = vadd.f32 %v329, %v311
        %v432 = vadd.f32 %v329, %v312
        %v433 = vadd.f32 %v329, %v313
        %v434 = vadd.f32 %v329, %v314
        %v435 = vadd.f32 %v329, %v315
        %v436 = vadd.f32 %v330, %v300
        %v437 = vadd.f32 %v330, %v301
        %v438 = vadd.f32 %v330, %v302
        %v439 = vadd.f32 %v330, %v303
        %v440 = vadd.f32 %v330, %v304
        %v441 = vadd.f32 %v330, %v305
        %v442 = vadd.f32 %v330, %v306
        %v443 = vadd.f32 %v330, %v307
        %v444 = vadd.f32 %v330, %v308
        %v445 = vadd.f32 %v330, %v309
        %v446 = vadd.f32 %v330, %v310
        %v447 = vadd.f32 %v330, %v311
        %v448 = vadd.f32 %v330, %v312
        %v449 = vadd.f32 %v330, %v313
        %v450 = vadd.f32 %v330, %v314
        %v451 = vadd.f32 %v330, %v315
        %v452 = vadd.f32 %v331, %v300
        %v453 = vadd.f32 %v331, %v301
        %v454 = vadd.f32 %v331, %v302
        %v455 = vadd.f32 %v331, %v303
        %v456 = vadd.f32 %v331, %v304
        %v457 = vadd.f32 %v331, %v305
        %v458 = vadd.f32 %v331, %v306
        %v459 = vadd.f32 %v331, %v307
        %v460 = vadd.f32 %v331, %v308
        %v461 = vadd.f32 %v331, %v309
        %v462 = vadd.f32 %v331, %v310
        %v463 = vadd.f32 %v331, %v311
        %v464 = vadd.f32 %v331, %v312
        %v465 = vadd.f32 %v331, %v313
        %v466 = vadd.f32 %v331, %v314
        %v467 = vadd.f32 %v331, %v315
        %v468 = vtanh.pop %v340
        %v469 = vtanh.pop %v341
        %v470 = vtanh.pop %v342
        %v471 = vtanh.pop %v343
        %v472 = vtanh.pop %v344
        %v473 = vtanh.pop %v345
        %v474 = vtanh.pop %v346
        %v475 = vtanh.pop %v347
        %v476 = vtanh.pop %v348
        %v477 = vtanh.pop %v349
        %v478 = vtanh.pop %v350
        %v479 = vtanh.pop %v351
        %v480 = vtanh.pop %v352
        %v481 = vtanh.pop %v353
        %v482 = vtanh.pop %v354
        %v483 = vtanh.pop %v355
        %v484 = vtanh.pop %v356
        %v485 = vtanh.pop %v357
        %v486 = vtanh.pop %v358
        %v487 = vtanh.pop %v359
        %v488 = vtanh.pop %v360
        %v489 = vtanh.pop %v361
        %v490 = vtanh.pop %v362
        %v491 = vtanh.pop %v363
        %v492 = vtanh.pop %v364
        %v493 = vtanh.pop %v365
        %v494 = vtanh.pop %v366
        %v495 = vtanh.pop %v367
        %v496 = vtanh.pop %v368
        %v497 = vtanh.pop %v369
        %v498 = vtanh.pop %v370
        %v499 = vtanh.pop %v371
        %v500 = vtanh.pop %v372
        %v501 = vtanh.pop %v373
        %v502 = vtanh.pop %v374
        %v503 = vtanh.pop %v375
        %v504 = vtanh.pop %v376
        %v505 = vtanh.pop %v377
        %v506 = vtanh.pop %v378
        %v507 = vtanh.pop %v379
        %v508 = vtanh.pop %v380
        %v509 = vtanh.pop %v381
        %v510 = vtanh.pop %v382
        %v511 = vtanh.pop %v383
        %v512 = vtanh.pop %v384
        %v513 = vtanh.pop %v385
        %v514 = vtanh.pop %v386
        %v515 = vtanh.pop %v387
        %v516 = vtanh.pop %v388
        %v517 = vtanh.pop %v389
        %v518 = vtanh.pop %v390
        %v519 = vtanh.pop %v391
        %v520 = vtanh.pop %v392
        %v521 = vtanh.pop %v393
        %v522 = vtanh.pop %v394
        %v523 = vtanh.pop %v395
        %v524 = vtanh.pop %v396
        %v525 = vtanh.pop %v397
        %v526 = vtanh.pop %v398
        %v527 = vtanh.pop %v399
        %v528 = vtanh.pop %v400
        %v529 = vtanh.pop %v401
        %v530 = vtanh.pop %v402
        %v531 = vtanh.pop %v403
        %v532 = vtanh.pop %v404
        %v533 = vtanh.pop %v405
        %v534 = vtanh.pop %v406
        %v535 = vtanh.pop %v407
        %v536 = vtanh.pop %v408
        %v537 = vtanh.pop %v409
        %v538 = vtanh.pop %v410
        %v539 = vtanh.pop %v411
        %v540 = vtanh.pop %v412
        %v541 = vtanh.pop %v413
        %v542 = vtanh.pop %v414
        %v543 = vtanh.pop %v415
        %v544 = vtanh.pop %v416
        %v545 = vtanh.pop %v417
        %v546 = vtanh.pop %v418
        %v547 = vtanh.pop %v419
        %v548 = vtanh.pop %v420
        %v549 = vtanh.pop %v421
        %v550 = vtanh.pop %v422
        %v551 = vtanh.pop %v423
        %v552 = vtanh.pop %v424
        %v553 = vtanh.pop %v425
        %v554 = vtanh.pop %v426
        %v555 = vtanh.pop %v427
        %v556 = vtanh.pop %v428
        %v557 = vtanh.pop %v429
        %v558 = vtanh.pop %v430
        %v559 = vtanh.pop %v431
        %v560 = vtanh.pop %v432
        %v561 = vtanh.pop %v433
        %v562 = vtanh.pop %v434
        %v563 = vtanh.pop %v435
        %v564 = vtanh.pop %v436
        %v565 = vtanh.pop %v437
        %v566 = vtanh.pop %v438
        %v567 = vtanh.pop %v439
        %v568 = vtanh.pop %v440
        %v569 = vtanh.pop %v441
        %v570 = vtanh.pop %v442
        %v571 = vtanh.pop %v443
        %v572 = vtanh.pop %v444
        %v573 = vtanh.pop %v445
        %v574 = vtanh.pop %v446
        %v575 = vtanh.pop %v447
        %v576 = vtanh.pop %v448
        %v577 = vtanh.pop %v449
        %v578 = vtanh.pop %v450
        %v579 = vtanh.pop %v451
        %v580 = vtanh.pop %v452
        %v581 = vtanh.pop %v453
        %v582 = vtanh.pop %v454
        %v583 = vtanh.pop %v455
        %v584 = vtanh.pop %v456
        %v585 = vtanh.pop %v457
        %v586 = vtanh.pop %v458
        %v587 = vtanh.pop %v459
        %v588 = vtanh.pop %v460
        %v589 = vtanh.pop %v461
        %v590 = vtanh.pop %v462
        %v591 = vtanh.pop %v463
        %v592 = vtanh.pop %v464
        %v593 = vtanh.pop %v465
        %v594 = vtanh.pop %v466
        %v595 = vtanh.pop %v467
        %v597 = vperm.slane %v299, 0
        %v599 = vmul.f32 %v468, %v597
        %v600 = vmul.f32 %v469, %v597
        %v601 = vmul.f32 %v470, %v597
        %v602 = vmul.f32 %v471, %v597
        %v603 = vmul.f32 %v472, %v597
        %v604 = vmul.f32 %v473, %v597
        %v605 = vmul.f32 %v474, %v597
        %v606 = vmul.f32 %v475, %v597
        %v607 = vmul.f32 %v476, %v597
        %v608 = vmul.f32 %v477, %v597
        %v609 = vmul.f32 %v478, %v597
        %v610 = vmul.f32 %v479, %v597
        %v611 = vmul.f32 %v480, %v597
        %v612 = vmul.f32 %v481, %v597
        %v613 = vmul.f32 %v482, %v597
        %v614 = vmul.f32 %v483, %v597
        %v615 = vmul.f32 %v484, %v597
        %v616 = vmul.f32 %v485, %v597
        %v617 = vmul.f32 %v486, %v597
        %v618 = vmul.f32 %v487, %v597
        %v619 = vmul.f32 %v488, %v597
        %v620 = vmul.f32 %v489, %v597
        %v621 = vmul.f32 %v490, %v597
        %v622 = vmul.f32 %v491, %v597
        %v623 = vmul.f32 %v492, %v597
        %v624 = vmul.f32 %v493, %v597
        %v625 = vmul.f32 %v494, %v597
        %v626 = vmul.f32 %v495, %v597
        %v627 = vmul.f32 %v496, %v597
        %v628 = vmul.f32 %v497, %v597
        %v629 = vmul.f32 %v498, %v597
        %v630 = vmul.f32 %v499, %v597
        %v631 = vmul.f32 %v500, %v597
        %v632 = vmul.f32 %v501, %v597
        %v633 = vmul.f32 %v502, %v597
        %v634 = vmul.f32 %v503, %v597
        %v635 = vmul.f32 %v504, %v597
        %v636 = vmul.f32 %v505, %v597
        %v637 = vmul.f32 %v506, %v597
        %v638 = vmul.f32 %v507, %v597
        %v639 = vmul.f32 %v508, %v597
        %v640 = vmul.f32 %v509, %v597
        %v641 = vmul.f32 %v510, %v597
        %v642 = vmul.f32 %v511, %v597
        %v643 = vmul.f32 %v512, %v597
        %v644 = vmul.f32 %v513, %v597
        %v645 = vmul.f32 %v514, %v597
        %v646 = vmul.f32 %v515, %v597
        %v647 = vmul.f32 %v516, %v597
        %v648 = vmul.f32 %v517, %v597
        %v649 = vmul.f32 %v518, %v597
        %v650 = vmul.f32 %v519, %v597
        %v651 = vmul.f32 %v520, %v597
        %v652 = vmul.f32 %v521, %v597
        %v653 = vmul.f32 %v522, %v597
        %v654 = vmul.f32 %v523, %v597
        %v655 = vmul.f32 %v524, %v597
        %v656 = vmul.f32 %v525, %v597
        %v657 = vmul.f32 %v526, %v597
        %v658 = vmul.f32 %v527, %v597
        %v659 = vmul.f32 %v528, %v597
        %v660 = vmul.f32 %v529, %v597
        %v661 = vmul.f32 %v530, %v597
        %v662 = vmul.f32 %v531, %v597
        %v663 = vmul.f32 %v532, %v597
        %v664 = vmul.f32 %v533, %v597
        %v665 = vmul.f32 %v534, %v597
        %v666 = vmul.f32 %v535, %v597
        %v667 = vmul.f32 %v536, %v597
        %v668 = vmul.f32 %v537, %v597
        %v669 = vmul.f32 %v538, %v597
        %v670 = vmul.f32 %v539, %v597
        %v671 = vmul.f32 %v540, %v597
        %v672 = vmul.f32 %v541, %v597
        %v673 = vmul.f32 %v542, %v597
        %v674 = vmul.f32 %v543, %v597
        %v675 = vmul.f32 %v544, %v597
        %v676 = vmul.f32 %v545, %v597
        %v677 = vmul.f32 %v546, %v597
        %v678 = vmul.f32 %v547, %v597
        %v679 = vmul.f32 %v548, %v597
        %v680 = vmul.f32 %v549, %v597
        %v681 = vmul.f32 %v550, %v597
        %v682 = vmul.f32 %v551, %v597
        %v683 = vmul.f32 %v552, %v597
        %v684 = vmul.f32 %v553, %v597
        %v685 = vmul.f32 %v554, %v597
        %v686 = vmul.f32 %v555, %v597
        %v687 = vmul.f32 %v556, %v597
        %v688 = vmul.f32 %v557, %v597
        %v689 = vmul.f32 %v558, %v597
        %v690 = vmul.f32 %v559, %v597
        %v691 = vmul.f32 %v560, %v597
        %v692 = vmul.f32 %v561, %v597
        %v693 = vmul.f32 %v562, %v597
        %v694 = vmul.f32 %v563, %v597
        %v695 = vmul.f32 %v564, %v597
        %v696 = vmul.f32 %v565, %v597
        %v697 = vmul.f32 %v566, %v597
        %v698 = vmul.f32 %v567, %v597
        %v699 = vmul.f32 %v568, %v597
        %v700 = vmul.f32 %v569, %v597
        %v701 = vmul.f32 %v570, %v597
        %v702 = vmul.f32 %v571, %v597
        %v703 = vmul.f32 %v572, %v597
        %v704 = vmul.f32 %v573, %v597
        %v705 = vmul.f32 %v574, %v597
        %v706 = vmul.f32 %v575, %v597
        %v707 = vmul.f32 %v576, %v597
        %v708 = vmul.f32 %v577, %v597
        %v709 = vmul.f32 %v578, %v597
        %v710 = vmul.f32 %v579, %v597
        %v711 = vmul.f32 %v580, %v597
        %v712 = vmul.f32 %v581, %v597
        %v713 = vmul.f32 %v582, %v597
        %v714 = vmul.f32 %v583, %v597
        %v715 = vmul.f32 %v584, %v597
        %v716 = vmul.f32 %v585, %v597
        %v717 = vmul.f32 %v586, %v597
        %v718 = vmul.f32 %v587, %v597
        %v719 = vmul.f32 %v588, %v597
        %v720 = vmul.f32 %v589, %v597
        %v721 = vmul.f32 %v590, %v597
        %v722 = vmul.f32 %v591, %v597
        %v723 = vmul.f32 %v592, %v597
        %v724 = vmul.f32 %v593, %v597
        %v725 = vmul.f32 %v594, %v597
        %v726 = vmul.f32 %v595, %v597
        %727 = vadd.xlane.f32.xlu0 %v599
        %v728 = vpop.xlane.xlu0 %727
        %729 = vadd.xlane.f32.xlu0 %v600
        %v730 = vpop.xlane.xlu0 %729
        %731 = vadd.xlane.f32.xlu0 %v601
        %v732 = vpop.xlane.xlu0 %731
        %733 = vadd.xlane.f32.xlu0 %v602
        %v734 = vpop.xlane.xlu0 %733
        %735 = vadd.xlane.f32.xlu0 %v603
        %v736 = vpop.xlane.xlu0 %735
        %737 = vadd.xlane.f32.xlu0 %v604
        %v738 = vpop.xlane.xlu0 %737
        %739 = vadd.xlane.f32.xlu0 %v605
        %v740 = vpop.xlane.xlu0 %739
        %741 = vadd.xlane.f32.xlu0 %v606
        %v742 = vpop.xlane.xlu0 %741
        %743 = vadd.xlane.f32.xlu0 %v607
        %v744 = vpop.xlane.xlu0 %743
        %745 = vadd.xlane.f32.xlu0 %v608
        %v746 = vpop.xlane.xlu0 %745
        %747 = vadd.xlane.f32.xlu0 %v609
        %v748 = vpop.xlane.xlu0 %747
        %749 = vadd.xlane.f32.xlu0 %v610
        %v750 = vpop.xlane.xlu0 %749
        %751 = vadd.xlane.f32.xlu0 %v611
        %v752 = vpop.xlane.xlu0 %751
        %753 = vadd.xlane.f32.xlu0 %v612
        %v754 = vpop.xlane.xlu0 %753
        %755 = vadd.xlane.f32.xlu0 %v613
        %v756 = vpop.xlane.xlu0 %755
        %757 = vadd.xlane.f32.xlu0 %v614
        %v758 = vpop.xlane.xlu0 %757
        %759 = vadd.xlane.f32.xlu0 %v615
        %v760 = vpop.xlane.xlu0 %759
        %761 = vadd.xlane.f32.xlu0 %v616
        %v762 = vpop.xlane.xlu0 %761
        %763 = vadd.xlane.f32.xlu0 %v617
        %v764 = vpop.xlane.xlu0 %763
        %765 = vadd.xlane.f32.xlu0 %v618
        %v766 = vpop.xlane.xlu0 %765
        %767 = vadd.xlane.f32.xlu0 %v619
        %v768 = vpop.xlane.xlu0 %767
        %769 = vadd.xlane.f32.xlu0 %v620
        %v770 = vpop.xlane.xlu0 %769
        %771 = vadd.xlane.f32.xlu0 %v621
        %v772 = vpop.xlane.xlu0 %771
        %773 = vadd.xlane.f32.xlu0 %v622
        %v774 = vpop.xlane.xlu0 %773
        %775 = vadd.xlane.f32.xlu0 %v623
        %v776 = vpop.xlane.xlu0 %775
        %777 = vadd.xlane.f32.xlu0 %v624
        %v778 = vpop.xlane.xlu0 %777
        %779 = vadd.xlane.f32.xlu0 %v625
        %v780 = vpop.xlane.xlu0 %779
        %781 = vadd.xlane.f32.xlu0 %v626
        %v782 = vpop.xlane.xlu0 %781
        %783 = vadd.xlane.f32.xlu0 %v627
        %v784 = vpop.xlane.xlu0 %783
        %785 = vadd.xlane.f32.xlu0 %v628
        %v786 = vpop.xlane.xlu0 %785
        %787 = vadd.xlane.f32.xlu0 %v629
        %v788 = vpop.xlane.xlu0 %787
        %789 = vadd.xlane.f32.xlu0 %v630
        %v790 = vpop.xlane.xlu0 %789
        %791 = vadd.xlane.f32.xlu0 %v631
        %v792 = vpop.xlane.xlu0 %791
        %793 = vadd.xlane.f32.xlu0 %v632
        %v794 = vpop.xlane.xlu0 %793
        %795 = vadd.xlane.f32.xlu0 %v633
        %v796 = vpop.xlane.xlu0 %795
        %797 = vadd.xlane.f32.xlu0 %v634
        %v798 = vpop.xlane.xlu0 %797
        %799 = vadd.xlane.f32.xlu0 %v635
        %v800 = vpop.xlane.xlu0 %799
        %801 = vadd.xlane.f32.xlu0 %v636
        %v802 = vpop.xlane.xlu0 %801
        %803 = vadd.xlane.f32.xlu0 %v637
        %v804 = vpop.xlane.xlu0 %803
        %805 = vadd.xlane.f32.xlu0 %v638
        %v806 = vpop.xlane.xlu0 %805
        %807 = vadd.xlane.f32.xlu0 %v639
        %v808 = vpop.xlane.xlu0 %807
        %809 = vadd.xlane.f32.xlu0 %v640
        %v810 = vpop.xlane.xlu0 %809
        %811 = vadd.xlane.f32.xlu0 %v641
        %v812 = vpop.xlane.xlu0 %811
        %813 = vadd.xlane.f32.xlu0 %v642
        %v814 = vpop.xlane.xlu0 %813
        %815 = vadd.xlane.f32.xlu0 %v643
        %v816 = vpop.xlane.xlu0 %815
        %817 = vadd.xlane.f32.xlu0 %v644
        %v818 = vpop.xlane.xlu0 %817
        %819 = vadd.xlane.f32.xlu0 %v645
        %v820 = vpop.xlane.xlu0 %819
        %821 = vadd.xlane.f32.xlu0 %v646
        %v822 = vpop.xlane.xlu0 %821
        %823 = vadd.xlane.f32.xlu0 %v647
        %v824 = vpop.xlane.xlu0 %823
        %825 = vadd.xlane.f32.xlu0 %v648
        %v826 = vpop.xlane.xlu0 %825
        %827 = vadd.xlane.f32.xlu0 %v649
        %v828 = vpop.xlane.xlu0 %827
        %829 = vadd.xlane.f32.xlu0 %v650
        %v830 = vpop.xlane.xlu0 %829
        %831 = vadd.xlane.f32.xlu0 %v651
        %v832 = vpop.xlane.xlu0 %831
        %833 = vadd.xlane.f32.xlu0 %v652
        %v834 = vpop.xlane.xlu0 %833
        %835 = vadd.xlane.f32.xlu0 %v653
        %v836 = vpop.xlane.xlu0 %835
        %837 = vadd.xlane.f32.xlu0 %v654
        %v838 = vpop.xlane.xlu0 %837
        %839 = vadd.xlane.f32.xlu0 %v655
        %v840 = vpop.xlane.xlu0 %839
        %841 = vadd.xlane.f32.xlu0 %v656
        %v842 = vpop.xlane.xlu0 %841
        %843 = vadd.xlane.f32.xlu0 %v657
        %v844 = vpop.xlane.xlu0 %843
        %845 = vadd.xlane.f32.xlu0 %v658
        %v846 = vpop.xlane.xlu0 %845
        %847 = vadd.xlane.f32.xlu0 %v659
        %v848 = vpop.xlane.xlu0 %847
        %849 = vadd.xlane.f32.xlu0 %v660
        %v850 = vpop.xlane.xlu0 %849
        %851 = vadd.xlane.f32.xlu0 %v661
        %v852 = vpop.xlane.xlu0 %851
        %853 = vadd.xlane.f32.xlu0 %v662
        %v854 = vpop.xlane.xlu0 %853
        %855 = vadd.xlane.f32.xlu0 %v663
        %v856 = vpop.xlane.xlu0 %855
        %857 = vadd.xlane.f32.xlu0 %v664
        %v858 = vpop.xlane.xlu0 %857
        %859 = vadd.xlane.f32.xlu0 %v665
        %v860 = vpop.xlane.xlu0 %859
        %861 = vadd.xlane.f32.xlu0 %v666
        %v862 = vpop.xlane.xlu0 %861
        %863 = vadd.xlane.f32.xlu0 %v667
        %v864 = vpop.xlane.xlu0 %863
        %865 = vadd.xlane.f32.xlu0 %v668
        %v866 = vpop.xlane.xlu0 %865
        %867 = vadd.xlane.f32.xlu0 %v669
        %v868 = vpop.xlane.xlu0 %867
        %869 = vadd.xlane.f32.xlu0 %v670
        %v870 = vpop.xlane.xlu0 %869
        %871 = vadd.xlane.f32.xlu0 %v671
        %v872 = vpop.xlane.xlu0 %871
        %873 = vadd.xlane.f32.xlu0 %v672
        %v874 = vpop.xlane.xlu0 %873
        %875 = vadd.xlane.f32.xlu0 %v673
        %v876 = vpop.xlane.xlu0 %875
        %877 = vadd.xlane.f32.xlu0 %v674
        %v878 = vpop.xlane.xlu0 %877
        %879 = vadd.xlane.f32.xlu0 %v675
        %v880 = vpop.xlane.xlu0 %879
        %881 = vadd.xlane.f32.xlu0 %v676
        %v882 = vpop.xlane.xlu0 %881
        %883 = vadd.xlane.f32.xlu0 %v677
        %v884 = vpop.xlane.xlu0 %883
        %885 = vadd.xlane.f32.xlu0 %v678
        %v886 = vpop.xlane.xlu0 %885
        %887 = vadd.xlane.f32.xlu0 %v679
        %v888 = vpop.xlane.xlu0 %887
        %889 = vadd.xlane.f32.xlu0 %v680
        %v890 = vpop.xlane.xlu0 %889
        %891 = vadd.xlane.f32.xlu0 %v681
        %v892 = vpop.xlane.xlu0 %891
        %893 = vadd.xlane.f32.xlu0 %v682
        %v894 = vpop.xlane.xlu0 %893
        %895 = vadd.xlane.f32.xlu0 %v683
        %v896 = vpop.xlane.xlu0 %895
        %897 = vadd.xlane.f32.xlu0 %v684
        %v898 = vpop.xlane.xlu0 %897
        %899 = vadd.xlane.f32.xlu0 %v685
        %v900 = vpop.xlane.xlu0 %899
        %901 = vadd.xlane.f32.xlu0 %v686
        %v902 = vpop.xlane.xlu0 %901
        %903 = vadd.xlane.f32.xlu0 %v687
        %v904 = vpop.xlane.xlu0 %903
        %905 = vadd.xlane.f32.xlu0 %v688
        %v906 = vpop.xlane.xlu0 %905
        %907 = vadd.xlane.f32.xlu0 %v689
        %v908 = vpop.xlane.xlu0 %907
        %909 = vadd.xlane.f32.xlu0 %v690
        %v910 = vpop.xlane.xlu0 %909
        %911 = vadd.xlane.f32.xlu0 %v691
        %v912 = vpop.xlane.xlu0 %911
        %913 = vadd.xlane.f32.xlu0 %v692
        %v914 = vpop.xlane.xlu0 %913
        %915 = vadd.xlane.f32.xlu0 %v693
        %v916 = vpop.xlane.xlu0 %915
        %917 = vadd.xlane.f32.xlu0 %v694
        %v918 = vpop.xlane.xlu0 %917
        %919 = vadd.xlane.f32.xlu0 %v695
        %v920 = vpop.xlane.xlu0 %919
        %921 = vadd.xlane.f32.xlu0 %v696
        %v922 = vpop.xlane.xlu0 %921
        %923 = vadd.xlane.f32.xlu0 %v697
        %v924 = vpop.xlane.xlu0 %923
        %925 = vadd.xlane.f32.xlu0 %v698
        %v926 = vpop.xlane.xlu0 %925
        %927 = vadd.xlane.f32.xlu0 %v699
        %v928 = vpop.xlane.xlu0 %927
        %929 = vadd.xlane.f32.xlu0 %v700
        %v930 = vpop.xlane.xlu0 %929
        %931 = vadd.xlane.f32.xlu0 %v701
        %v932 = vpop.xlane.xlu0 %931
        %933 = vadd.xlane.f32.xlu0 %v702
        %v934 = vpop.xlane.xlu0 %933
        %935 = vadd.xlane.f32.xlu0 %v703
        %v936 = vpop.xlane.xlu0 %935
        %937 = vadd.xlane.f32.xlu0 %v704
        %v938 = vpop.xlane.xlu0 %937
        %939 = vadd.xlane.f32.xlu0 %v705
        %v940 = vpop.xlane.xlu0 %939
        %941 = vadd.xlane.f32.xlu0 %v706
        %v942 = vpop.xlane.xlu0 %941
        %943 = vadd.xlane.f32.xlu0 %v707
        %v944 = vpop.xlane.xlu0 %943
        %945 = vadd.xlane.f32.xlu0 %v708
        %v946 = vpop.xlane.xlu0 %945
        %947 = vadd.xlane.f32.xlu0 %v709
        %v948 = vpop.xlane.xlu0 %947
        %949 = vadd.xlane.f32.xlu0 %v710
        %v950 = vpop.xlane.xlu0 %949
        %951 = vadd.xlane.f32.xlu0 %v711
        %v952 = vpop.xlane.xlu0 %951
        %953 = vadd.xlane.f32.xlu0 %v712
        %v954 = vpop.xlane.xlu0 %953
        %955 = vadd.xlane.f32.xlu0 %v713
        %v956 = vpop.xlane.xlu0 %955
        %957 = vadd.xlane.f32.xlu0 %v714
        %v958 = vpop.xlane.xlu0 %957
        %959 = vadd.xlane.f32.xlu0 %v715
        %v960 = vpop.xlane.xlu0 %959
        %961 = vadd.xlane.f32.xlu0 %v716
        %v962 = vpop.xlane.xlu0 %961
        %963 = vadd.xlane.f32.xlu0 %v717
        %v964 = vpop.xlane.xlu0 %963
        %965 = vadd.xlane.f32.xlu0 %v718
        %v966 = vpop.xlane.xlu0 %965
        %967 = vadd.xlane.f32.xlu0 %v719
        %v968 = vpop.xlane.xlu0 %967
        %969 = vadd.xlane.f32.xlu0 %v720
        %v970 = vpop.xlane.xlu0 %969
        %971 = vadd.xlane.f32.xlu0 %v721
        %v972 = vpop.xlane.xlu0 %971
        %973 = vadd.xlane.f32.xlu0 %v722
        %v974 = vpop.xlane.xlu0 %973
        %975 = vadd.xlane.f32.xlu0 %v723
        %v976 = vpop.xlane.xlu0 %975
        %977 = vadd.xlane.f32.xlu0 %v724
        %v978 = vpop.xlane.xlu0 %977
        %979 = vadd.xlane.f32.xlu0 %v725
        %v980 = vpop.xlane.xlu0 %979
        %981 = vadd.xlane.f32.xlu0 %v726
        %v982 = vpop.xlane.xlu0 %981
        %v1111 = vlaneseq
        %v1112 = vand.u32 %v1111, 127
        %v1113 = vperm.slane %v728, %v1112
        %v1114 = vadd.s32 %v1112, 4294967288
        %v1115 = vperm.slane %v730, %v1114
        %vm1116 = vcmask 130112
        %v1117 = vsel %vm1116, %v1115, %v1113
        %v1118 = vadd.s32 %v1112, 4294967280
        %v1119 = vperm.slane %v732, %v1118
        %vm1120 = vcmask 195712
        %v1121 = vsel %vm1120, %v1119, %v1117
        %v1122 = vadd.s32 %v1112, 4294967272
        %v1123 = vperm.slane %v734, %v1122
        %vm1124 = vcmask 261312
        %v1125 = vsel %vm1124, %v1123, %v1121
        %v1126 = vadd.s32 %v1112, 4294967264
        %v1127 = vperm.slane %v736, %v1126
        %vm1128 = vcmask 326912
        %v1129 = vsel %vm1128, %v1127, %v1125
        %v1130 = vadd.s32 %v1112, 4294967256
        %v1131 = vperm.slane %v738, %v1130
        %vm1132 = vcmask 392512
        %v1133 = vsel %vm1132, %v1131, %v1129
        %v1134 = vadd.s32 %v1112, 4294967248
        %v1135 = vperm.slane %v740, %v1134
        %vm1136 = vcmask 458112
        %v1137 = vsel %vm1136, %v1135, %v1133
        %v1138 = vadd.s32 %v1112, 4294967240
        %v1139 = vperm.slane %v742, %v1138
        %vm1140 = vcmask 523712
        %v1141 = vsel %vm1140, %v1139, %v1137
        %v1142 = vadd.s32 %v1112, 4294967232
        %v1143 = vperm.slane %v744, %v1142
        %vm1144 = vcmask 589312
        %v1145 = vsel %vm1144, %v1143, %v1141
        %v1146 = vadd.s32 %v1112, 4294967224
        %v1147 = vperm.slane %v746, %v1146
        %vm1148 = vcmask 654912
        %v1149 = vsel %vm1148, %v1147, %v1145
        %v1150 = vadd.s32 %v1112, 4294967216
        %v1151 = vperm.slane %v748, %v1150
        %vm1152 = vcmask 720512
        %v1153 = vsel %vm1152, %v1151, %v1149
        %v1154 = vadd.s32 %v1112, 4294967208
        %v1155 = vperm.slane %v750, %v1154
        %vm1156 = vcmask 786112
        %v1157 = vsel %vm1156, %v1155, %v1153
        %v1158 = vadd.s32 %v1112, 4294967200
        %v1159 = vperm.slane %v752, %v1158
        %vm1160 = vcmask 851712
        %v1161 = vsel %vm1160, %v1159, %v1157
        %v1162 = vadd.s32 %v1112, 4294967192
        %v1163 = vperm.slane %v754, %v1162
        %vm1164 = vcmask 917312
        %v1165 = vsel %vm1164, %v1163, %v1161
        %v1166 = vadd.s32 %v1112, 4294967184
        %v1167 = vperm.slane %v756, %v1166
        %vm1168 = vcmask 982912
        %v1169 = vsel %vm1168, %v1167, %v1165
        %v1170 = vadd.s32 %v1112, 4294967176
        %v1171 = vperm.slane %v758, %v1170
        %vm1172 = vcmask 1048512
        %v1173 = vsel %vm1172, %v1171, %v1169
        %v1174 = vperm.slane %v760, %v1112
        %v1175 = vperm.slane %v762, %v1114
        %v1176 = vsel %vm1116, %v1175, %v1174
        %v1177 = vperm.slane %v764, %v1118
        %v1178 = vsel %vm1120, %v1177, %v1176
        %v1179 = vperm.slane %v766, %v1122
        %v1180 = vsel %vm1124, %v1179, %v1178
        %v1181 = vperm.slane %v768, %v1126
        %v1182 = vsel %vm1128, %v1181, %v1180
        %v1183 = vperm.slane %v770, %v1130
        %v1184 = vsel %vm1132, %v1183, %v1182
        %v1185 = vperm.slane %v772, %v1134
        %v1186 = vsel %vm1136, %v1185, %v1184
        %v1187 = vperm.slane %v774, %v1138
        %v1188 = vsel %vm1140, %v1187, %v1186
        %v1189 = vperm.slane %v776, %v1142
        %v1190 = vsel %vm1144, %v1189, %v1188
        %v1191 = vperm.slane %v778, %v1146
        %v1192 = vsel %vm1148, %v1191, %v1190
        %v1193 = vperm.slane %v780, %v1150
        %v1194 = vsel %vm1152, %v1193, %v1192
        %v1195 = vperm.slane %v782, %v1154
        %v1196 = vsel %vm1156, %v1195, %v1194
        %v1197 = vperm.slane %v784, %v1158
        %v1198 = vsel %vm1160, %v1197, %v1196
        %v1199 = vperm.slane %v786, %v1162
        %v1200 = vsel %vm1164, %v1199, %v1198
        %v1201 = vperm.slane %v788, %v1166
        %v1202 = vsel %vm1168, %v1201, %v1200
        %v1203 = vperm.slane %v790, %v1170
        %v1204 = vsel %vm1172, %v1203, %v1202
        %v1205 = vperm.slane %v792, %v1112
        %v1206 = vperm.slane %v794, %v1114
        %v1207 = vsel %vm1116, %v1206, %v1205
        %v1208 = vperm.slane %v796, %v1118
        %v1209 = vsel %vm1120, %v1208, %v1207
        %v1210 = vperm.slane %v798, %v1122
        %v1211 = vsel %vm1124, %v1210, %v1209
        %v1212 = vperm.slane %v800, %v1126
        %v1213 = vsel %vm1128, %v1212, %v1211
        %v1214 = vperm.slane %v802, %v1130
        %v1215 = vsel %vm1132, %v1214, %v1213
        %v1216 = vperm.slane %v804, %v1134
        %v1217 = vsel %vm1136, %v1216, %v1215
        %v1218 = vperm.slane %v806, %v1138
        %v1219 = vsel %vm1140, %v1218, %v1217
        %v1220 = vperm.slane %v808, %v1142
        %v1221 = vsel %vm1144, %v1220, %v1219
        %v1222 = vperm.slane %v810, %v1146
        %v1223 = vsel %vm1148, %v1222, %v1221
        %v1224 = vperm.slane %v812, %v1150
        %v1225 = vsel %vm1152, %v1224, %v1223
        %v1226 = vperm.slane %v814, %v1154
        %v1227 = vsel %vm1156, %v1226, %v1225
        %v1228 = vperm.slane %v816, %v1158
        %v1229 = vsel %vm1160, %v1228, %v1227
        %v1230 = vperm.slane %v818, %v1162
        %v1231 = vsel %vm1164, %v1230, %v1229
        %v1232 = vperm.slane %v820, %v1166
        %v1233 = vsel %vm1168, %v1232, %v1231
        %v1234 = vperm.slane %v822, %v1170
        %v1235 = vsel %vm1172, %v1234, %v1233
        %v1236 = vperm.slane %v824, %v1112
        %v1237 = vperm.slane %v826, %v1114
        %v1238 = vsel %vm1116, %v1237, %v1236
        %v1239 = vperm.slane %v828, %v1118
        %v1240 = vsel %vm1120, %v1239, %v1238
        %v1241 = vperm.slane %v830, %v1122
        %v1242 = vsel %vm1124, %v1241, %v1240
        %v1243 = vperm.slane %v832, %v1126
        %v1244 = vsel %vm1128, %v1243, %v1242
        %v1245 = vperm.slane %v834, %v1130
        %v1246 = vsel %vm1132, %v1245, %v1244
        %v1247 = vperm.slane %v836, %v1134
        %v1248 = vsel %vm1136, %v1247, %v1246
        %v1249 = vperm.slane %v838, %v1138
        %v1250 = vsel %vm1140, %v1249, %v1248
        %v1251 = vperm.slane %v840, %v1142
        %v1252 = vsel %vm1144, %v1251, %v1250
        %v1253 = vperm.slane %v842, %v1146
        %v1254 = vsel %vm1148, %v1253, %v1252
        %v1255 = vperm.slane %v844, %v1150
        %v1256 = vsel %vm1152, %v1255, %v1254
        %v1257 = vperm.slane %v846, %v1154
        %v1258 = vsel %vm1156, %v1257, %v1256
        %v1259 = vperm.slane %v848, %v1158
        %v1260 = vsel %vm1160, %v1259, %v1258
        %v1261 = vperm.slane %v850, %v1162
        %v1262 = vsel %vm1164, %v1261, %v1260
        %v1263 = vperm.slane %v852, %v1166
        %v1264 = vsel %vm1168, %v1263, %v1262
        %v1265 = vperm.slane %v854, %v1170
        %v1266 = vsel %vm1172, %v1265, %v1264
        %v1267 = vperm.slane %v856, %v1112
        %v1268 = vperm.slane %v858, %v1114
        %v1269 = vsel %vm1116, %v1268, %v1267
        %v1270 = vperm.slane %v860, %v1118
        %v1271 = vsel %vm1120, %v1270, %v1269
        %v1272 = vperm.slane %v862, %v1122
        %v1273 = vsel %vm1124, %v1272, %v1271
        %v1274 = vperm.slane %v864, %v1126
        %v1275 = vsel %vm1128, %v1274, %v1273
        %v1276 = vperm.slane %v866, %v1130
        %v1277 = vsel %vm1132, %v1276, %v1275
        %v1278 = vperm.slane %v868, %v1134
        %v1279 = vsel %vm1136, %v1278, %v1277
        %v1280 = vperm.slane %v870, %v1138
        %v1281 = vsel %vm1140, %v1280, %v1279
        %v1282 = vperm.slane %v872, %v1142
        %v1283 = vsel %vm1144, %v1282, %v1281
        %v1284 = vperm.slane %v874, %v1146
        %v1285 = vsel %vm1148, %v1284, %v1283
        %v1286 = vperm.slane %v876, %v1150
        %v1287 = vsel %vm1152, %v1286, %v1285
        %v1288 = vperm.slane %v878, %v1154
        %v1289 = vsel %vm1156, %v1288, %v1287
        %v1290 = vperm.slane %v880, %v1158
        %v1291 = vsel %vm1160, %v1290, %v1289
        %v1292 = vperm.slane %v882, %v1162
        %v1293 = vsel %vm1164, %v1292, %v1291
        %v1294 = vperm.slane %v884, %v1166
        %v1295 = vsel %vm1168, %v1294, %v1293
        %v1296 = vperm.slane %v886, %v1170
        %v1297 = vsel %vm1172, %v1296, %v1295
        %v1298 = vperm.slane %v888, %v1112
        %v1299 = vperm.slane %v890, %v1114
        %v1300 = vsel %vm1116, %v1299, %v1298
        %v1301 = vperm.slane %v892, %v1118
        %v1302 = vsel %vm1120, %v1301, %v1300
        %v1303 = vperm.slane %v894, %v1122
        %v1304 = vsel %vm1124, %v1303, %v1302
        %v1305 = vperm.slane %v896, %v1126
        %v1306 = vsel %vm1128, %v1305, %v1304
        %v1307 = vperm.slane %v898, %v1130
        %v1308 = vsel %vm1132, %v1307, %v1306
        %v1309 = vperm.slane %v900, %v1134
        %v1310 = vsel %vm1136, %v1309, %v1308
        %v1311 = vperm.slane %v902, %v1138
        %v1312 = vsel %vm1140, %v1311, %v1310
        %v1313 = vperm.slane %v904, %v1142
        %v1314 = vsel %vm1144, %v1313, %v1312
        %v1315 = vperm.slane %v906, %v1146
        %v1316 = vsel %vm1148, %v1315, %v1314
        %v1317 = vperm.slane %v908, %v1150
        %v1318 = vsel %vm1152, %v1317, %v1316
        %v1319 = vperm.slane %v910, %v1154
        %v1320 = vsel %vm1156, %v1319, %v1318
        %v1321 = vperm.slane %v912, %v1158
        %v1322 = vsel %vm1160, %v1321, %v1320
        %v1323 = vperm.slane %v914, %v1162
        %v1324 = vsel %vm1164, %v1323, %v1322
        %v1325 = vperm.slane %v916, %v1166
        %v1326 = vsel %vm1168, %v1325, %v1324
        %v1327 = vperm.slane %v918, %v1170
        %v1328 = vsel %vm1172, %v1327, %v1326
        %v1329 = vperm.slane %v920, %v1112
        %v1330 = vperm.slane %v922, %v1114
        %v1331 = vsel %vm1116, %v1330, %v1329
        %v1332 = vperm.slane %v924, %v1118
        %v1333 = vsel %vm1120, %v1332, %v1331
        %v1334 = vperm.slane %v926, %v1122
        %v1335 = vsel %vm1124, %v1334, %v1333
        %v1336 = vperm.slane %v928, %v1126
        %v1337 = vsel %vm1128, %v1336, %v1335
        %v1338 = vperm.slane %v930, %v1130
        %v1339 = vsel %vm1132, %v1338, %v1337
        %v1340 = vperm.slane %v932, %v1134
        %v1341 = vsel %vm1136, %v1340, %v1339
        %v1342 = vperm.slane %v934, %v1138
        %v1343 = vsel %vm1140, %v1342, %v1341
        %v1344 = vperm.slane %v936, %v1142
        %v1345 = vsel %vm1144, %v1344, %v1343
        %v1346 = vperm.slane %v938, %v1146
        %v1347 = vsel %vm1148, %v1346, %v1345
        %v1348 = vperm.slane %v940, %v1150
        %v1349 = vsel %vm1152, %v1348, %v1347
        %v1350 = vperm.slane %v942, %v1154
        %v1351 = vsel %vm1156, %v1350, %v1349
        %v1352 = vperm.slane %v944, %v1158
        %v1353 = vsel %vm1160, %v1352, %v1351
        %v1354 = vperm.slane %v946, %v1162
        %v1355 = vsel %vm1164, %v1354, %v1353
        %v1356 = vperm.slane %v948, %v1166
        %v1357 = vsel %vm1168, %v1356, %v1355
        %v1358 = vperm.slane %v950, %v1170
        %v1359 = vsel %vm1172, %v1358, %v1357
        %v1360 = vperm.slane %v952, %v1112
        %v1361 = vperm.slane %v954, %v1114
        %v1362 = vsel %vm1116, %v1361, %v1360
        %v1363 = vperm.slane %v956, %v1118
        %v1364 = vsel %vm1120, %v1363, %v1362
        %v1365 = vperm.slane %v958, %v1122
        %v1366 = vsel %vm1124, %v1365, %v1364
        %v1367 = vperm.slane %v960, %v1126
        %v1368 = vsel %vm1128, %v1367, %v1366
        %v1369 = vperm.slane %v962, %v1130
        %v1370 = vsel %vm1132, %v1369, %v1368
        %v1371 = vperm.slane %v964, %v1134
        %v1372 = vsel %vm1136, %v1371, %v1370
        %v1373 = vperm.slane %v966, %v1138
        %v1374 = vsel %vm1140, %v1373, %v1372
        %v1375 = vperm.slane %v968, %v1142
        %v1376 = vsel %vm1144, %v1375, %v1374
        %v1377 = vperm.slane %v970, %v1146
        %v1378 = vsel %vm1148, %v1377, %v1376
        %v1379 = vperm.slane %v972, %v1150
        %v1380 = vsel %vm1152, %v1379, %v1378
        %v1381 = vperm.slane %v974, %v1154
        %v1382 = vsel %vm1156, %v1381, %v1380
        %v1383 = vperm.slane %v976, %v1158
        %v1384 = vsel %vm1160, %v1383, %v1382
        %v1385 = vperm.slane %v978, %v1162
        %v1386 = vsel %vm1164, %v1385, %v1384
        %v1387 = vperm.slane %v980, %v1166
        %v1388 = vsel %vm1168, %v1387, %v1386
        %v1389 = vperm.slane %v982, %v1170
        %v1390 = vsel %vm1172, %v1389, %v1388
        %vm1391 = vcmask 1041409
        %v1392 = vsel %vm1391, %v1204, %v1173
        %vm1393 = vcmask 1042434
        %v1394 = vsel %vm1393, %v1235, %v1392
        %vm1395 = vcmask 1043459
        %v1396 = vsel %vm1395, %v1266, %v1394
        %vm1397 = vcmask 1044484
        %v1398 = vsel %vm1397, %v1297, %v1396
        %vm1399 = vcmask 1045509
        %v1400 = vsel %vm1399, %v1328, %v1398
        %vm1401 = vcmask 1046534
        %v1402 = vsel %vm1401, %v1359, %v1400
        %vm1403 = vcmask 1047559
        %v1404 = vsel %vm1403, %v1390, %v1402
        %1406 = vst [vmem:[#allocation2] sm:$0xff] %v1404
        %v1407 = vld [vmem:[#allocation2] sm:$0xff]
        %vm1408 = vcmp.lt.s32.totalorder %v1112, 8
        %v1409 = vsel %vm1408, %v1407, -1e+30
        %1410 = vmax.xlane.f32.xlu0 %v1409
        %v1411 = vpop.xlane.xlu0 %1410
        %v1412 = vsub.f32 %v1409, %v1411
        %v1413 = vmul.f32 %v1412, 1.442695
        %v1414 = vpow.pop %v1413
        %1415 = vadd.xlane.f32.xlu0 %v1414
        %v1416 = vpop.xlane.xlu0 %1415
        %v1417 = vrcp.pop %v1416
        %v1418 = vmul.f32 %v1416, %v1417
        %v1419 = vsub.f32 1.0, %v1418
        %v1420 = vmul.f32 %v1417, %v1419
        %v1421 = vadd.f32 %v1417, %v1420
        %vm1422 = vweird.f32 %v1416
        %vm1423 = vweird.f32 %v1417
        %vm1424 = vmor %vm1422, %vm1423
        %v1425 = vsel %vm1424, %v1417, %v1421
        %v1426 = vand.u32 2147483647, %v1416
        %vm1427 = vcmp.eq.f32.partialorder %v1426, 8.507059e+37
        %v1428 = vand.u32 %v1416, 2147483648
        %v1429 = vor.u32 1.1754944e-38, %v1428
        %v1430 = vsel %vm1427, %v1429, %v1425
        %v1431 = vmul.f32 1.0, %v1430
        %v1432 = vmul.f32 %v1414, %v1431
        %1433 = vst [vmem:[%s280] sm:$0xff] %v1432
        %v1434 = vld [vmem:[%s297] sm:$0xff]
        %v1435 = vld [vmem:[%s297 + $0x8] sm:$0xff]
        %v1436 = vld [vmem:[%s297 + $0x10] sm:$0xff]
        %v1437 = vld [vmem:[%s297 + $0x18] sm:$0xff]
        %v1438 = vld [vmem:[%s297 + $0x20] sm:$0xff]
        %v1439 = vld [vmem:[%s297 + $0x28] sm:$0xff]
        %v1440 = vld [vmem:[%s297 + $0x30] sm:$0xff]
        %v1441 = vld [vmem:[%s297 + $0x38] sm:$0xff]
        %v1442 = vld [vmem:[%s297 + $0x40] sm:$0xff]
        %v1443 = vld [vmem:[%s297 + $0x48] sm:$0xff]
        %v1444 = vld [vmem:[%s297 + $0x50] sm:$0xff]
        %v1445 = vld [vmem:[%s297 + $0x58] sm:$0xff]
        %v1446 = vld [vmem:[%s297 + $0x60] sm:$0xff]
        %v1447 = vld [vmem:[%s297 + $0x68] sm:$0xff]
        %v1448 = vld [vmem:[%s297 + $0x70] sm:$0xff]
        %v1449 = vld [vmem:[%s297 + $0x78] sm:$0xff]
        %1450 = vmatpush.msra.mxu0 %v1449
        %1451 = vmatpush.msra.mxu0 %v1448
        %1452 = vmatpush.msra.mxu0 %v1447
        %1453 = vmatpush.msra.mxu0 %v1446
        %1454 = vmatpush.msra.mxu0 %v1445
        %1455 = vmatpush.msra.mxu0 %v1444
        %1456 = vmatpush.msra.mxu0 %v1443
        %1457 = vmatpush.msra.mxu0 %v1442
        %1458 = vmatpush.msra.mxu0 %v1441
        %1459 = vmatpush.msra.mxu0 %v1440
        %1460 = vmatpush.msra.mxu0 %v1439
        %1461 = vmatpush.msra.mxu0 %v1438
        %1462 = vmatpush.msra.mxu0 %v1437
        %1463 = vmatpush.msra.mxu0 %v1436
        %1464 = vmatpush.msra.mxu0 %v1435
        %1465 = vmatpush.msra.mxu0 %v1434
        %1466 = vmatmul.f32.gmra.mxu0 %v1432
        %v1467 = vpop.f32.mrf.mxu0
        %v1468 = vadd.f32 0.0, %v1467
        %1469 = vdwg.mxu0
        %1470 = vst [vmem:[%s273] sm:$0xff] %v1468
        %s1471 = sand.u32 %s146, 1
        %s1472 = scalar_lea.sflag [#allocation4], %s1471
        %s1473 = sand.u32 %s146, 1
        %s1474 = smul.addr %s1473, 8
        %s1475 = scalar_lea.vmem [#allocation3], %s1474
        %s1476 = sand.u32 %s174, 1
        %s1477 = scalar_lea.sflag [#allocation6], %s1476
        %s1478 = sand.u32 %s174, 1
        %s1479 = smul.addr %s1478, 8
        %s1480 = scalar_lea.vmem [#allocation5], %s1479
        // Predicated region
        $region37: #{flowtron_attention.1} parent=35 // pred_check
          %p1481 = pneg %p156
        $region38: #{flowtron_attention.1} parent=35 // pred_check_branch
          %1483 = sbr.rel (%p1481) target = $region40
        $region39: #{flowtron_attention.1} parent=35 // pred_region
          %1485 = vsyncadd %s1472, 0
          %s1486 = sadd.s32 %s28, %s27
          %s1487 = smul.addr %s1486, 8
          %s1488 = scalar_lea.hbm %s4, %s1487
          %s1490 = sshll.u32 %s1475, 4
          %s1491 = int_to_ptr.vmem [resolvable:$true] %s1490
          %s1492 = sshll.u32 %s1488, 4
          %s1493 = int_to_ptr.hbm [resolvable:$true] %s1492
          %1495 = dma.vmem_to_hbm [thread:$0]  %s1491, 128, %s1493, %s1472
        $region40: #{flowtron_attention.1} parent=35 // pred_fallthru
          _
        // Predicated region
        $region41: #{flowtron_attention.1} parent=35 // pred_check
          %p1496 = pneg %p184
        $region42: #{flowtron_attention.1} parent=35 // pred_check_branch
          %1498 = sbr.rel (%p1496) target = $region44
        $region43: #{flowtron_attention.1} parent=35 // pred_region
          %1500 = vsyncadd %s1477, 0
          %s1501 = sadd.s32 %s28, %s27
          %s1502 = smul.addr %s1501, 8
          %s1503 = scalar_lea.hbm %s5, %s1502
          %s1505 = sshll.u32 %s1480, 4
          %s1506 = int_to_ptr.vmem [resolvable:$true] %s1505
          %s1507 = sshll.u32 %s1503, 4
          %s1508 = int_to_ptr.hbm [resolvable:$true] %s1507
          %1510 = dma.vmem_to_hbm [thread:$0]  %s1506, 128, %s1508, %s1477
        $region44: #{flowtron_attention.1} parent=35 // pred_fallthru
          _
      $region36: #{flowtron_attention.1} parent=5 // pred_fallthru
        _
      %p1511 = scmp.le.s32.totalorder 2, %s18
      // Predicated region
      $region45: #{flowtron_attention.1} parent=5 // pred_check
        %p1512 = pneg %p1511
      $region46: #{flowtron_attention.1} parent=5 // pred_check_branch
        %1514 = sbr.rel (%p1512) target = $region48
      $region47: #{flowtron_attention.1} parent=5 // pred_region
        %s1515 = ssub.s32 %s18, 2
        // Predicated region
        $region49: #{flowtron_attention.1} parent=47 // pred_check
          %p1516 = pneg %p162
        $region50: #{flowtron_attention.1} parent=47 // pred_check_branch
          %1518 = sbr.rel (%p1516) target = $region52
        $region51: #{flowtron_attention.1} parent=47 // pred_region
          %s1519 = sand.u32 %s147, 1
          %s1520 = scalar_lea.sflag [#allocation4], %s1519
          %s1521 = sand.u32 %s147, 1
          %s1522 = smul.addr %s1521, 8
          %s1523 = scalar_lea.vmem [#allocation3], %s1522
          %1525 = dma.done %s1520, 128
        $region52: #{flowtron_attention.1} parent=47 // pred_fallthru
          _
        // Predicated region
        $region53: #{flowtron_attention.1} parent=47 // pred_check
          %p1526 = pneg %p190
        $region54: #{flowtron_attention.1} parent=47 // pred_check_branch
          %1528 = sbr.rel (%p1526) target = $region56
        $region55: #{flowtron_attention.1} parent=47 // pred_region
          %s1529 = sand.u32 %s175, 1
          %s1530 = scalar_lea.sflag [#allocation6], %s1529
          %s1531 = sand.u32 %s175, 1
          %s1532 = smul.addr %s1531, 8
          %s1533 = scalar_lea.vmem [#allocation5], %s1532
          %1535 = dma.done %s1530, 128
        $region56: #{flowtron_attention.1} parent=47 // pred_fallthru
          _
      $region48: #{flowtron_attention.1} parent=5 // pred_fallthru
        _
    $region6: #{flowtron_attention.1} parent=1 // loop_footer
      %s22 = sadd.s32 1, %s18
    $region7: #{flowtron_attention.1} parent=1 // loop_footer_branch
      %17 = sbr.rel target = $region3
    $region8: #{flowtron_attention.1} parent=1 // loop_exit
      _
    %1536 = vsyncpa [#allocation4], 1
    %s1537 = scalar_lea.sflag [#allocation4], 1
    %1538 = vsyncpa %s1537, 1
    %1539 = vsyncpa [#allocation6], 1
    %s1540 = scalar_lea.sflag [#allocation6], 1
    %1541 = vsyncpa %s1540, 1

</llo_original>
